<compile_context>
chip_gen: v6e
topology: v6e:2x2x1
jax: 0.10.0
libtpu: 0.0.40
codegen_flags: <defaults>
</compile_context>

<pallas_src>
import numpy as np
import jax
import jax.numpy as jnp
from jax.experimental import pallas as pl
from jax.experimental.pallas import tpu as pltpu

# ------------------------- config (stand-in for argparse opt) ----------------
N_CLASSES = 8          # opt.n_classes
IMG_SHAPE = (2,)       # img_shape
IMG_DIM = int(np.prod(IMG_SHAPE))
H1, H2, D_OUT = 512, 256, 1
D_OUT_PAD = 128        # lane-dense output slab; real validity lives in column 0
LEAKY_SLOPE = 0.2
TILE_B = 256           # batch tile (full MXU M on v6e/v7x; small B collapses to 1 tile)


# ------------------------------- Pallas kernel --------------------------------
def _disc_kernel(lab_ref, img_ref, w1i_ref, w1e_ref,
                 w2_ref, b2_ref, w3_ref, b3_ref, o_ref):
    # One batch tile: fused embedding+layer-1 class table, VPU image FMA, MLP.
    labels = lab_ref[...]                                           # (TB, 1) i32
    classes = jax.lax.broadcasted_iota(
        jnp.int32, (labels.shape[0], N_CLASSES), 1)                 # (TB, C)
    one_hot = (labels == classes).astype(w1e_ref.dtype)             # (TB, C)

    # Layer 1:
    #   class half  : one_hot @ (embedding @ W1_emb + b1)   -- single MXU matmul,
    #                 bias folds exactly (one-hot rows sum to 1)
    #   image half  : K=2 handled on the VPU as two broadcast-FMAs
    h = jnp.dot(one_hot, w1e_ref[...], preferred_element_type=jnp.float32)
    img = img_ref[...]                                               # (TB, 2) f32
    w1i = w1i_ref[...]                                               # (2, H1) f32
    h = h + img[:, 0:1] * w1i[0:1, :] + img[:, 1:2] * w1i[1:2, :]
    h = jnp.maximum(h, LEAKY_SLOPE * h)                              # LeakyReLU(0.2), f32

    # Layer 2
    h = jnp.dot(h.astype(w2_ref.dtype), w2_ref[...],
                preferred_element_type=jnp.float32) + b2_ref[...]
    h = jnp.maximum(h, LEAKY_SLOPE * h)

    # Layer 3 (padded to 128 output lanes -> unmasked lane-dense stores)
    out = jnp.dot(h.astype(w3_ref.dtype), w3_ref[...],
                  preferred_element_type=jnp.float32) + b3_ref[...]
    o_ref[...] = out.astype(o_ref.dtype)


# ------------------------------ param preparation -----------------------------
def prepare_params(embedding, params, compute_dtype=jnp.float32):
    """One-time weight transforms, hoisted out of the jitted forward."""
    w1, b1, w2, b2, w3, b3 = params
    # Image half of W1 stays f32 (VPU broadcast-FMA path; tiny).
    w1_img = w1[:IMG_DIM, :].astype(jnp.float32)                     # (2, H1)
    # Fused class table: embedding lookup, W1_emb matmul and b1 all fold into (C, H1).
    w1e_table = (embedding.astype(jnp.float32)
                 @ w1[IMG_DIM:, :].astype(jnp.float32)
                 + b1.astype(jnp.float32)).astype(compute_dtype)     # (C, H1)
    # Lane-dense output: pad final layer from 1 to 128 output columns.
    w3_pad = jnp.zeros((H2, D_OUT_PAD), jnp.float32).at[:, :D_OUT].set(w3)
    b3_pad = jnp.zeros((1, D_OUT_PAD), jnp.float32).at[:, :D_OUT].set(b3)
    return (w1_img, w1e_table,
            w2.astype(compute_dtype), b2.astype(jnp.float32),
            w3_pad.astype(compute_dtype), b3_pad.astype(jnp.float32))


def _round_up(x, m):
    return ((x + m - 1) // m) * m


# ------------------------------- full forward ---------------------------------
def discriminator_forward(img, labels, prepared, *, tile_b=TILE_B):
    """img: (B, 2) f32; labels: (B_lab,) i32; returns validity (B, 1) f32."""
    w1_img, w1e_table, w2, b2, w3_pad, b3_pad = prepared
    B = img.shape[0]
    assert B % labels.shape[0] == 0, "B_img must be a multiple of B_lab"
    rep = B // labels.shape[0]
    labels_rep = jnp.repeat(labels, rep).astype(jnp.int32)           # repeat_interleave

    # Tile selection: small batches collapse to a single grid step (single-TC
    # v5e/v6e advice); large batches tile at `tile_b` rows ("parallel" axis
    # shards tiles across both TensorCores on v7x).
    tile_b = min(tile_b, _round_up(B, 8))
    B_pad = _round_up(B, tile_b)

    img2d = img.reshape(B, -1).astype(jnp.float32)
    if B_pad != B:
        img2d = jnp.pad(img2d, ((0, B_pad - B), (0, 0)))
        labels_rep = jnp.pad(labels_rep, (0, B_pad - B))
    lab2d = labels_rep.reshape(B_pad, 1)

    n_tiles = B_pad // tile_b

    def resident(arr):  # constant block index -> weight stays in VMEM across tiles
        return pl.BlockSpec(arr.shape, lambda i: (0,) * arr.ndim)

    out_pad = pl.pallas_call(
        _disc_kernel,
        out_shape=jax.ShapeDtypeStruct((B_pad, D_OUT_PAD), jnp.float32),
        grid_spec=pltpu.PrefetchScalarGridSpec(
            num_scalar_prefetch=0,
            grid=(n_tiles,),
            in_specs=[
                pl.BlockSpec((tile_b, 1), lambda i: (i, 0)),         # labels tile
                pl.BlockSpec((tile_b, IMG_DIM), lambda i: (i, 0)),   # img tile
                resident(w1_img), resident(w1e_table),
                resident(w2), resident(b2),
                resident(w3_pad), resident(b3_pad),
            ],
            out_specs=pl.BlockSpec((tile_b, D_OUT_PAD), lambda i: (i, 0)),
        ),
        compiler_params=pltpu.CompilerParams(
            dimension_semantics=("parallel",)),
    )(lab2d, img2d, w1_img, w1e_table, w2, b2, w3_pad, b3_pad)

    return out_pad[:B, :D_OUT]


# ------------------------------- params ---------------------------------------
def init_params(key):
    ks = jax.random.split(key, 7)

    # nn.Linear default init: U(-1/sqrt(fan_in), 1/sqrt(fan_in)) for W and b.
    def linear(kw, kb, fan_in, fan_out):
        bound = 1.0 / np.sqrt(fan_in)
        w = jax.random.uniform(kw, (fan_in, fan_out), jnp.float32, -bound, bound)
        b = jax.random.uniform(kb, (1, fan_out), jnp.float32, -bound, bound)
        return w, b

    w1, b1 = linear(ks[0], ks[1], N_CLASSES + IMG_DIM, H1)
    w2, b2 = linear(ks[2], ks[3], H1, H2)
    w3, b3 = linear(ks[4], ks[5], H2, D_OUT)
    # nn.Embedding default init: N(0, 1)
    embedding = jax.random.normal(ks[6], (N_CLASSES, N_CLASSES), jnp.float32)
    return embedding, (w1, b1, w2, b2, w3, b3)


# ------------------------------- main ------------------------------------------
if __name__ == "__main__":
    key = jax.random.PRNGKey(0)
    k_img, k_lab, k_par = jax.random.split(key, 3)

    # 256 rows -> one 256-row tile (fills MXU M); repeat_interleave factor = 4.
    B_IMG, B_LAB = 256, 64
    img = jax.random.normal(k_img, (B_IMG, IMG_DIM), jnp.float32)
    labels = jax.random.randint(k_lab, (B_LAB,), 0, N_CLASSES, jnp.int32)

    embedding, params = init_params(k_par)

    # plain-JAX reference (matches the PyTorch forward)
    def ref(img, labels):
        B = img.shape[0]
        rep = B // labels.shape[0]
        lab_emb = jnp.take(embedding, jnp.repeat(labels, rep), axis=0)
        x = jnp.concatenate([img.reshape(B, -1), lab_emb], -1)
        w1, b1, w2, b2, w3, b3 = params
        h = x @ w1 + b1
        h = jnp.where(h > 0, h, LEAKY_SLOPE * h)
        h = h @ w2 + b2
        h = jnp.where(h > 0, h, LEAKY_SLOPE * h)
        return h @ w3 + b3

    expected = np.asarray(ref(img, labels))

    fwd = jax.jit(discriminator_forward)

    # f32 path (default): tight check against the reference.
    prep_f32 = prepare_params(embedding, params, jnp.float32)
    validity = jax.block_until_ready(fwd(img, labels, prep_f32))
    assert validity.shape == (B_IMG, 1)
    np.testing.assert_allclose(np.asarray(validity), expected, rtol=1e-5, atol=1e-4)

    # bf16 weights/activations with f32 accumulation: the v6e/v7x MXU/DMA lever.
    prep_bf16 = prepare_params(embedding, params, jnp.bfloat16)
    validity_bf16 = jax.block_until_ready(fwd(img, labels, prep_bf16))
    np.testing.assert_allclose(np.asarray(validity_bf16), expected, rtol=5e-2, atol=5e-2)

    print("KERNEL_OK")
</pallas_src>

<mosaic_0001>
module attributes {stable_mosaic.version = 11 : i64} {
  func.func @_disc_kernel(%arg0: i32, %arg1: memref<256x1xi32, #tpu.memory_space<vmem>>, %arg2: memref<256x2xf32, #tpu.memory_space<vmem>>, %arg3: memref<2x512xf32, #tpu.memory_space<vmem>>, %arg4: memref<8x512xf32, #tpu.memory_space<vmem>>, %arg5: memref<512x256xf32, #tpu.memory_space<vmem>>, %arg6: memref<1x256xf32, #tpu.memory_space<vmem>>, %arg7: memref<256x128xf32, #tpu.memory_space<vmem>>, %arg8: memref<1x128xf32, #tpu.memory_space<vmem>>, %arg9: memref<256x128xf32, #tpu.memory_space<vmem>>) attributes {dimension_semantics = [#tpu.dimension_semantics<parallel>], iteration_bounds = array<i64: 1>, scalar_prefetch = 0 : i64, scratch_operands = 0 : i64, tpu.core_type = #tpu.core_type<tc>, window_params = [{transform_indices = @transform_0, window_bounds = array<i64: 256, 1>}, {transform_indices = @transform_1, window_bounds = array<i64: 256, 2>}, {pipeline_mode = #tpu.pipeline_mode<synchronous>, transform_indices = @transform_2, window_bounds = array<i64: 2, 512>}, {pipeline_mode = #tpu.pipeline_mode<synchronous>, transform_indices = @transform_3, window_bounds = array<i64: 8, 512>}, {pipeline_mode = #tpu.pipeline_mode<synchronous>, transform_indices = @transform_4, window_bounds = array<i64: 512, 256>}, {pipeline_mode = #tpu.pipeline_mode<synchronous>, transform_indices = @transform_5, window_bounds = array<i64: 1, 256>}, {pipeline_mode = #tpu.pipeline_mode<synchronous>, transform_indices = @transform_6, window_bounds = array<i64: 256, 128>}, {pipeline_mode = #tpu.pipeline_mode<synchronous>, transform_indices = @transform_7, window_bounds = array<i64: 1, 128>}, {transform_indices = @transform_8, window_bounds = array<i64: 256, 128>}]} {
    %c0 = arith.constant 0 : index
    %c0_0 = arith.constant 0 : index
    %0 = vector.load %arg1[%c0, %c0_0] : memref<256x1xi32, #tpu.memory_space<vmem>>, vector<256x1xi32>
    %1 = tpu.iota {dimensions = array<i32: 1>} : vector<256x8xi32>
    %2 = vector.broadcast %0 : vector<256x1xi32> to vector<256x8xi32>
    %3 = arith.cmpi eq, %2, %1 : vector<256x8xi32>
    %4 = arith.extui %3 : vector<256x8xi1> to vector<256x8xi32>
    %5 = arith.sitofp %4 : vector<256x8xi32> to vector<256x8xf32>
    %c0_1 = arith.constant 0 : index
    %c0_2 = arith.constant 0 : index
    %6 = vector.load %arg4[%c0_1, %c0_2] : memref<8x512xf32, #tpu.memory_space<vmem>>, vector<8x512xf32>
    %cst = arith.constant dense<0.000000e+00> : vector<256x512xf32>
    %7 = tpu.matmul %5, %6, %cst {dimension_numbers = #tpu.dot_dimension_numbers<[1], [0], [0], [1], [0, 0, 1, 1], [], []>} : vector<256x8xf32>, vector<8x512xf32>, vector<256x512xf32> -> vector<256x512xf32>
    %c0_3 = arith.constant 0 : index
    %c0_4 = arith.constant 0 : index
    %8 = vector.load %arg2[%c0_3, %c0_4] : memref<256x2xf32, #tpu.memory_space<vmem>>, vector<256x2xf32>
    %c0_5 = arith.constant 0 : index
    %c0_6 = arith.constant 0 : index
    %9 = vector.load %arg3[%c0_5, %c0_6] : memref<2x512xf32, #tpu.memory_space<vmem>>, vector<2x512xf32>
    %10 = vector.extract_strided_slice %8 {offsets = [0, 0], sizes = [256, 1], strides = [1, 1]} : vector<256x2xf32> to vector<256x1xf32>
    %11 = vector.extract_strided_slice %9 {offsets = [0, 0], sizes = [1, 512], strides = [1, 1]} : vector<2x512xf32> to vector<1x512xf32>
    %12 = vector.broadcast %10 : vector<256x1xf32> to vector<256x512xf32>
    %13 = vector.broadcast %11 : vector<1x512xf32> to vector<256x512xf32>
    %14 = arith.mulf %12, %13 : vector<256x512xf32>
    %15 = arith.addf %7, %14 : vector<256x512xf32>
    %16 = vector.extract_strided_slice %8 {offsets = [0, 1], sizes = [256, 1], strides = [1, 1]} : vector<256x2xf32> to vector<256x1xf32>
    %17 = vector.extract_strided_slice %9 {offsets = [1, 0], sizes = [1, 512], strides = [1, 1]} : vector<2x512xf32> to vector<1x512xf32>
    %18 = vector.broadcast %16 : vector<256x1xf32> to vector<256x512xf32>
    %19 = vector.broadcast %17 : vector<1x512xf32> to vector<256x512xf32>
    %20 = arith.mulf %18, %19 : vector<256x512xf32>
    %21 = arith.addf %15, %20 : vector<256x512xf32>
    %cst_7 = arith.constant 2.000000e-01 : f32
    %22 = vector.broadcast %cst_7 : f32 to vector<256x512xf32>
    %23 = arith.mulf %22, %21 : vector<256x512xf32>
    %24 = arith.maximumf %21, %23 : vector<256x512xf32>
    %c0_8 = arith.constant 0 : index
    %c0_9 = arith.constant 0 : index
    %25 = vector.load %arg5[%c0_8, %c0_9] : memref<512x256xf32, #tpu.memory_space<vmem>>, vector<512x256xf32>
    %cst_10 = arith.constant dense<0.000000e+00> : vector<256x256xf32>
    %26 = tpu.matmul %24, %25, %cst_10 {dimension_numbers = #tpu.dot_dimension_numbers<[1], [0], [0], [1], [0, 0, 1, 1], [], []>} : vector<256x512xf32>, vector<512x256xf32>, vector<256x256xf32> -> vector<256x256xf32>
    %c0_11 = arith.constant 0 : index
    %c0_12 = arith.constant 0 : index
    %27 = vector.load %arg6[%c0_11, %c0_12] : memref<1x256xf32, #tpu.memory_space<vmem>>, vector<1x256xf32>
    %28 = vector.broadcast %27 : vector<1x256xf32> to vector<256x256xf32>
    %29 = arith.addf %26, %28 : vector<256x256xf32>
    %cst_13 = arith.constant 2.000000e-01 : f32
    %30 = vector.broadcast %cst_13 : f32 to vector<256x256xf32>
    %31 = arith.mulf %30, %29 : vector<256x256xf32>
    %32 = arith.maximumf %29, %31 : vector<256x256xf32>
    %c0_14 = arith.constant 0 : index
    %c0_15 = arith.constant 0 : index
    %33 = vector.load %arg7[%c0_14, %c0_15] : memref<256x128xf32, #tpu.memory_space<vmem>>, vector<256x128xf32>
    %cst_16 = arith.constant dense<0.000000e+00> : vector<256x128xf32>
    %34 = tpu.matmul %32, %33, %cst_16 {dimension_numbers = #tpu.dot_dimension_numbers<[1], [0], [0], [1], [0, 0, 1, 1], [], []>} : vector<256x256xf32>, vector<256x128xf32>, vector<256x128xf32> -> vector<256x128xf32>
    %c0_17 = arith.constant 0 : index
    %c0_18 = arith.constant 0 : index
    %35 = vector.load %arg8[%c0_17, %c0_18] : memref<1x128xf32, #tpu.memory_space<vmem>>, vector<1x128xf32>
    %36 = vector.broadcast %35 : vector<1x128xf32> to vector<256x128xf32>
    %37 = arith.addf %34, %36 : vector<256x128xf32>
    %c0_19 = arith.constant 0 : index
    %c0_20 = arith.constant 0 : index
    %38 = vector.load %arg9[%c0_19, %c0_20] : memref<256x128xf32, #tpu.memory_space<vmem>>, vector<256x128xf32>
    tpu.vector_store %arg9[%c0_19, %c0_20], %37 {strides = array<i32>} : memref<256x128xf32, #tpu.memory_space<vmem>>, vector<256x128xf32>,
    return
  }
  func.func @transform_0(%arg0: i32) -> (i32, i32) {
    %c0_i32 = arith.constant 0 : i32
    %c0_i32_0 = arith.constant 0 : i32
    return %arg0, %c0_i32 : i32, i32
  }
  func.func @transform_1(%arg0: i32) -> (i32, i32) {
    %c0_i32 = arith.constant 0 : i32
    %c0_i32_0 = arith.constant 0 : i32
    return %arg0, %c0_i32 : i32, i32
  }
  func.func @transform_2(%arg0: i32) -> (i32, i32) {
    %c0_i32 = arith.constant 0 : i32
    %c0_i32_0 = arith.constant 0 : i32
    %c0_i32_1 = arith.constant 0 : i32
    return %c0_i32, %c0_i32_0 : i32, i32
  }
  func.func @transform_3(%arg0: i32) -> (i32, i32) {
    %c0_i32 = arith.constant 0 : i32
    %c0_i32_0 = arith.constant 0 : i32
    %c0_i32_1 = arith.constant 0 : i32
    return %c0_i32, %c0_i32_0 : i32, i32
  }
  func.func @transform_4(%arg0: i32) -> (i32, i32) {
    %c0_i32 = arith.constant 0 : i32
    %c0_i32_0 = arith.constant 0 : i32
    %c0_i32_1 = arith.constant 0 : i32
    return %c0_i32, %c0_i32_0 : i32, i32
  }
  func.func @transform_5(%arg0: i32) -> (i32, i32) {
    %c0_i32 = arith.constant 0 : i32
    %c0_i32_0 = arith.constant 0 : i32
    %c0_i32_1 = arith.constant 0 : i32
    return %c0_i32, %c0_i32_0 : i32, i32
  }
  func.func @transform_6(%arg0: i32) -> (i32, i32) {
    %c0_i32 = arith.constant 0 : i32
    %c0_i32_0 = arith.constant 0 : i32
    %c0_i32_1 = arith.constant 0 : i32
    return %c0_i32, %c0_i32_0 : i32, i32
  }
  func.func @transform_7(%arg0: i32) -> (i32, i32) {
    %c0_i32 = arith.constant 0 : i32
    %c0_i32_0 = arith.constant 0 : i32
    %c0_i32_1 = arith.constant 0 : i32
    return %c0_i32, %c0_i32_0 : i32, i32
  }
  func.func @transform_8(%arg0: i32) -> (i32, i32) {
    %c0_i32 = arith.constant 0 : i32
    %c0_i32_0 = arith.constant 0 : i32
    return %arg0, %c0_i32 : i32, i32
  }
}

</mosaic_0001>

<llo_original>
// kernel: discriminator_forward.1
$region0: #{discriminator_forward.1}
  #allocation0 [shape = 'u32[]', space=smem, size = 0x4, offset = 0x4, fixed_abs, tag = 'smem constant byte address 0x4 - core index']
  #allocation1 [shape = 'u32[144,128]{1,0:T(1,128)}', space=vmem, size = 0x12000, scoped, tag = 'internal scratch']
  %s0 = inlined_call_operand.vmem [shape: s32[256,1], index: 0, kind: input, shape index: {}]
  %s1 = inlined_call_operand.vmem [shape: f32[256,2], index: 1, kind: input, shape index: {}]
  %s2 = inlined_call_operand.vmem [shape: f32[2,512], index: 2, kind: input, shape index: {}]
  %s3 = inlined_call_operand.vmem [shape: f32[8,512], index: 3, kind: input, shape index: {}]
  %s4 = inlined_call_operand.hbm [shape: f32[512,256], index: 4, kind: input, shape index: {}]
  %s5 = inlined_call_operand.vmem [shape: f32[1,256], index: 5, kind: input, shape index: {}]
  %s6 = inlined_call_operand.vmem [shape: f32[256,128], index: 6, kind: input, shape index: {}]
  %s7 = inlined_call_operand.vmem [shape: f32[1,128], index: 7, kind: input, shape index: {}]
  %s8 = inlined_call_operand.vmem [shape: f32[256,128], index: 8, kind: output, shape index: {}]
  %s9 = sld [smem:[#allocation0]]
  $region46: #{discriminator_forward.1} parent=0
    _
  %s11 = ssub.s32 1, %s9
  %s12 = scalar_select 0, %s11, %s9
  $region1: #{discriminator_forward.1} parent=0
    #allocation2 [shape = 'u8[524288]{0}', space=vmem, size = 0x80000, scoped, tag = 'input window, operand 4, single buffered']
    #allocation3 [shape = 's32[1]{0}', space=sflag, size = 0x4, scoped, tag = 'scoped memory for discriminator_forward.1']
    %13 = vsyncpa [#allocation3], 0
    // Predicated region
    $region2: #{discriminator_forward.1} parent=1 // pred_check
      _
    $region3: #{discriminator_forward.1} parent=1 // pred_check_branch
      %15 = sbr.rel (0) target = $region5
    $region4: #{discriminator_forward.1} parent=1 // pred_region
      _
    $region5: #{discriminator_forward.1} parent=1 // pred_fallthru
      _
    // Predicated region
    $region6: #{discriminator_forward.1} parent=1 // pred_check
      _
    $region7: #{discriminator_forward.1} parent=1 // pred_check_branch
      %17 = sbr.rel (0) target = $region9
    $region8: #{discriminator_forward.1} parent=1 // pred_region
      _
    $region9: #{discriminator_forward.1} parent=1 // pred_fallthru
      _
    // Predicated region
    $region10: #{discriminator_forward.1} parent=1 // pred_check
      _
    $region11: #{discriminator_forward.1} parent=1 // pred_check_branch
      %19 = sbr.rel (0) target = $region13
    $region12: #{discriminator_forward.1} parent=1 // pred_region
      _
    $region13: #{discriminator_forward.1} parent=1 // pred_fallthru
      _
    // Predicated region
    $region14: #{discriminator_forward.1} parent=1 // pred_check
      _
    $region15: #{discriminator_forward.1} parent=1 // pred_check_branch
      %21 = sbr.rel (0) target = $region17
    $region16: #{discriminator_forward.1} parent=1 // pred_region
      _
    $region17: #{discriminator_forward.1} parent=1 // pred_fallthru
      _
    // Predicated region
    $region18: #{discriminator_forward.1} parent=1 // pred_check
      _
    $region19: #{discriminator_forward.1} parent=1 // pred_check_branch
      %23 = sbr.rel (0) target = $region21
    $region20: #{discriminator_forward.1} parent=1 // pred_region
      %s25 = ssub.s32 16384, 16384
      %26 = vsyncadd [#allocation3], %s25
      %s27 = sshll.u32 [#allocation2], 4
      %s28 = int_to_ptr.vmem [resolvable:$true] %s27
      %33 = dma.hbm_to_vmem [thread:$0]  %s4, 16384, %s28, [#allocation3], 256, 256, 16
    $region21: #{discriminator_forward.1} parent=1 // pred_fallthru
      _
    // Predicated region
    $region22: #{discriminator_forward.1} parent=1 // pred_check
      _
    $region23: #{discriminator_forward.1} parent=1 // pred_check_branch
      %35 = sbr.rel (0) target = $region25
    $region24: #{discriminator_forward.1} parent=1 // pred_region
      _
    $region25: #{discriminator_forward.1} parent=1 // pred_fallthru
      _
    // Predicated region
    $region26: #{discriminator_forward.1} parent=1 // pred_check
      _
    $region27: #{discriminator_forward.1} parent=1 // pred_check_branch
      %37 = sbr.rel (0) target = $region29
    $region28: #{discriminator_forward.1} parent=1 // pred_region
      _
    $region29: #{discriminator_forward.1} parent=1 // pred_fallthru
      _
    // Predicated region
    $region30: #{discriminator_forward.1} parent=1 // pred_check
      _
    $region31: #{discriminator_forward.1} parent=1 // pred_check_branch
      %39 = sbr.rel (0) target = $region33
    $region32: #{discriminator_forward.1} parent=1 // pred_region
      _
    $region33: #{discriminator_forward.1} parent=1 // pred_fallthru
      _
    // Predicated region
    $region34: #{discriminator_forward.1} parent=1 // pred_check
      _
    $region35: #{discriminator_forward.1} parent=1 // pred_check_branch
      %41 = sbr.rel (0) target = $region37
    $region36: #{discriminator_forward.1} parent=1 // pred_region
      %42 = dma.done [#allocation3], 16384
    $region37: #{discriminator_forward.1} parent=1 // pred_fallthru
      _
    %v43 = vld [vmem:[%s0] sm:$0xff]
    %v44 = vld [vmem:[%s0 + $0x8] sm:$0xff]
    %v45 = vld [vmem:[%s0 + $0x10] sm:$0xff]
    %v46 = vld [vmem:[%s0 + $0x18] sm:$0xff]
    %v47 = vld [vmem:[%s0 + $0x20] sm:$0xff]
    %v48 = vld [vmem:[%s0 + $0x28] sm:$0xff]
    %v49 = vld [vmem:[%s0 + $0x30] sm:$0xff]
    %v50 = vld [vmem:[%s0 + $0x38] sm:$0xff]
    %v51 = vld [vmem:[%s0 + $0x40] sm:$0xff]
    %v52 = vld [vmem:[%s0 + $0x48] sm:$0xff]
    %v53 = vld [vmem:[%s0 + $0x50] sm:$0xff]
    %v54 = vld [vmem:[%s0 + $0x58] sm:$0xff]
    %v55 = vld [vmem:[%s0 + $0x60] sm:$0xff]
    %v56 = vld [vmem:[%s0 + $0x68] sm:$0xff]
    %v57 = vld [vmem:[%s0 + $0x70] sm:$0xff]
    %v58 = vld [vmem:[%s0 + $0x78] sm:$0xff]
    %v59 = vld [vmem:[%s0 + $0x80] sm:$0xff]
    %v60 = vld [vmem:[%s0 + $0x88] sm:$0xff]
    %v61 = vld [vmem:[%s0 + $0x90] sm:$0xff]
    %v62 = vld [vmem:[%s0 + $0x98] sm:$0xff]
    %v63 = vld [vmem:[%s0 + $0xa0] sm:$0xff]
    %v64 = vld [vmem:[%s0 + $0xa8] sm:$0xff]
    %v65 = vld [vmem:[%s0 + $0xb0] sm:$0xff]
    %v66 = vld [vmem:[%s0 + $0xb8] sm:$0xff]
    %v67 = vld [vmem:[%s0 + $0xc0] sm:$0xff]
    %v68 = vld [vmem:[%s0 + $0xc8] sm:$0xff]
    %v69 = vld [vmem:[%s0 + $0xd0] sm:$0xff]
    %v70 = vld [vmem:[%s0 + $0xd8] sm:$0xff]
    %v71 = vld [vmem:[%s0 + $0xe0] sm:$0xff]
    %v72 = vld [vmem:[%s0 + $0xe8] sm:$0xff]
    %v73 = vld [vmem:[%s0 + $0xf0] sm:$0xff]
    %v74 = vld [vmem:[%s0 + $0xf8] sm:$0xff]
    %v75 = vlaneseq
    %v76 = vand.u32 %v75, 127
    %77 = vset.pattern.permute.xlu0 0
    %78 = vperm.xlu0 %77, %v43
    %v79 = vpop.permute.xlu0 %78
    %80 = vset.pattern.permute.xlu0 0
    %81 = vperm.xlu0 %80, %v44
    %v82 = vpop.permute.xlu0 %81
    %83 = vset.pattern.permute.xlu0 0
    %84 = vperm.xlu0 %83, %v45
    %v85 = vpop.permute.xlu0 %84
    %86 = vset.pattern.permute.xlu0 0
    %87 = vperm.xlu0 %86, %v46
    %v88 = vpop.permute.xlu0 %87
    %89 = vset.pattern.permute.xlu0 0
    %90 = vperm.xlu0 %89, %v47
    %v91 = vpop.permute.xlu0 %90
    %92 = vset.pattern.permute.xlu0 0
    %93 = vperm.xlu0 %92, %v48
    %v94 = vpop.permute.xlu0 %93
    %95 = vset.pattern.permute.xlu0 0
    %96 = vperm.xlu0 %95, %v49
    %v97 = vpop.permute.xlu0 %96
    %98 = vset.pattern.permute.xlu0 0
    %99 = vperm.xlu0 %98, %v50
    %v100 = vpop.permute.xlu0 %99
    %101 = vset.pattern.permute.xlu0 0
    %102 = vperm.xlu0 %101, %v51
    %v103 = vpop.permute.xlu0 %102
    %104 = vset.pattern.permute.xlu0 0
    %105 = vperm.xlu0 %104, %v52
    %v106 = vpop.permute.xlu0 %105
    %107 = vset.pattern.permute.xlu0 0
    %108 = vperm.xlu0 %107, %v53
    %v109 = vpop.permute.xlu0 %108
    %110 = vset.pattern.permute.xlu0 0
    %111 = vperm.xlu0 %110, %v54
    %v112 = vpop.permute.xlu0 %111
    %113 = vset.pattern.permute.xlu0 0
    %114 = vperm.xlu0 %113, %v55
    %v115 = vpop.permute.xlu0 %114
    %116 = vset.pattern.permute.xlu0 0
    %117 = vperm.xlu0 %116, %v56
    %v118 = vpop.permute.xlu0 %117
    %119 = vset.pattern.permute.xlu0 0
    %120 = vperm.xlu0 %119, %v57
    %v121 = vpop.permute.xlu0 %120
    %122 = vset.pattern.permute.xlu0 0
    %123 = vperm.xlu0 %122, %v58
    %v124 = vpop.permute.xlu0 %123
    %125 = vset.pattern.permute.xlu0 0
    %126 = vperm.xlu0 %125, %v59
    %v127 = vpop.permute.xlu0 %126
    %128 = vset.pattern.permute.xlu0 0
    %129 = vperm.xlu0 %128, %v60
    %v130 = vpop.permute.xlu0 %129
    %131 = vset.pattern.permute.xlu0 0
    %132 = vperm.xlu0 %131, %v61
    %v133 = vpop.permute.xlu0 %132
    %134 = vset.pattern.permute.xlu0 0
    %135 = vperm.xlu0 %134, %v62
    %v136 = vpop.permute.xlu0 %135
    %137 = vset.pattern.permute.xlu0 0
    %138 = vperm.xlu0 %137, %v63
    %v139 = vpop.permute.xlu0 %138
    %140 = vset.pattern.permute.xlu0 0
    %141 = vperm.xlu0 %140, %v64
    %v142 = vpop.permute.xlu0 %141
    %143 = vset.pattern.permute.xlu0 0
    %144 = vperm.xlu0 %143, %v65
    %v145 = vpop.permute.xlu0 %144
    %146 = vset.pattern.permute.xlu0 0
    %147 = vperm.xlu0 %146, %v66
    %v148 = vpop.permute.xlu0 %147
    %149 = vset.pattern.permute.xlu0 0
    %150 = vperm.xlu0 %149, %v67
    %v151 = vpop.permute.xlu0 %150
    %152 = vset.pattern.permute.xlu0 0
    %153 = vperm.xlu0 %152, %v68
    %v154 = vpop.permute.xlu0 %153
    %155 = vset.pattern.permute.xlu0 0
    %156 = vperm.xlu0 %155, %v69
    %v157 = vpop.permute.xlu0 %156
    %158 = vset.pattern.permute.xlu0 0
    %159 = vperm.xlu0 %158, %v70
    %v160 = vpop.permute.xlu0 %159
    %161 = vset.pattern.permute.xlu0 0
    %162 = vperm.xlu0 %161, %v71
    %v163 = vpop.permute.xlu0 %162
    %164 = vset.pattern.permute.xlu0 0
    %165 = vperm.xlu0 %164, %v72
    %v166 = vpop.permute.xlu0 %165
    %167 = vset.pattern.permute.xlu0 0
    %168 = vperm.xlu0 %167, %v73
    %v169 = vpop.permute.xlu0 %168
    %170 = vset.pattern.permute.xlu0 0
    %171 = vperm.xlu0 %170, %v74
    %v172 = vpop.permute.xlu0 %171
    %vm173 = vcmp.eq.s32.totalorder %v79, %v76
    %vm174 = vcmp.eq.s32.totalorder %v82, %v76
    %vm175 = vcmp.eq.s32.totalorder %v85, %v76
    %vm176 = vcmp.eq.s32.totalorder %v88, %v76
    %vm177 = vcmp.eq.s32.totalorder %v91, %v76
    %vm178 = vcmp.eq.s32.totalorder %v94, %v76
    %vm179 = vcmp.eq.s32.totalorder %v97, %v76
    %vm180 = vcmp.eq.s32.totalorder %v100, %v76
    %vm181 = vcmp.eq.s32.totalorder %v103, %v76
    %vm182 = vcmp.eq.s32.totalorder %v106, %v76
    %vm183 = vcmp.eq.s32.totalorder %v109, %v76
    %vm184 = vcmp.eq.s32.totalorder %v112, %v76
    %vm185 = vcmp.eq.s32.totalorder %v115, %v76
    %vm186 = vcmp.eq.s32.totalorder %v118, %v76
    %vm187 = vcmp.eq.s32.totalorder %v121, %v76
    %vm188 = vcmp.eq.s32.totalorder %v124, %v76
    %vm189 = vcmp.eq.s32.totalorder %v127, %v76
    %vm190 = vcmp.eq.s32.totalorder %v130, %v76
    %vm191 = vcmp.eq.s32.totalorder %v133, %v76
    %vm192 = vcmp.eq.s32.totalorder %v136, %v76
    %vm193 = vcmp.eq.s32.totalorder %v139, %v76
    %vm194 = vcmp.eq.s32.totalorder %v142, %v76
    %vm195 = vcmp.eq.s32.totalorder %v145, %v76
    %vm196 = vcmp.eq.s32.totalorder %v148, %v76
    %vm197 = vcmp.eq.s32.totalorder %v151, %v76
    %vm198 = vcmp.eq.s32.totalorder %v154, %v76
    %vm199 = vcmp.eq.s32.totalorder %v157, %v76
    %vm200 = vcmp.eq.s32.totalorder %v160, %v76
    %vm201 = vcmp.eq.s32.totalorder %v163, %v76
    %vm202 = vcmp.eq.s32.totalorder %v166, %v76
    %vm203 = vcmp.eq.s32.totalorder %v169, %v76
    %vm204 = vcmp.eq.s32.totalorder %v172, %v76
    %v205 = vsel %vm173, 1, 0
    %v206 = vsel %vm174, 1, 0
    %v207 = vsel %vm175, 1, 0
    %v208 = vsel %vm176, 1, 0
    %v209 = vsel %vm177, 1, 0
    %v210 = vsel %vm178, 1, 0
    %v211 = vsel %vm179, 1, 0
    %v212 = vsel %vm180, 1, 0
    %v213 = vsel %vm181, 1, 0
    %v214 = vsel %vm182, 1, 0
    %v215 = vsel %vm183, 1, 0
    %v216 = vsel %vm184, 1, 0
    %v217 = vsel %vm185, 1, 0
    %v218 = vsel %vm186, 1, 0
    %v219 = vsel %vm187, 1, 0
    %v220 = vsel %vm188, 1, 0
    %v221 = vsel %vm189, 1, 0
    %v222 = vsel %vm190, 1, 0
    %v223 = vsel %vm191, 1, 0
    %v224 = vsel %vm192, 1, 0
    %v225 = vsel %vm193, 1, 0
    %v226 = vsel %vm194, 1, 0
    %v227 = vsel %vm195, 1, 0
    %v228 = vsel %vm196, 1, 0
    %v229 = vsel %vm197, 1, 0
    %v230 = vsel %vm198, 1, 0
    %v231 = vsel %vm199, 1, 0
    %v232 = vsel %vm200, 1, 0
    %v233 = vsel %vm201, 1, 0
    %v234 = vsel %vm202, 1, 0
    %v235 = vsel %vm203, 1, 0
    %v236 = vsel %vm204, 1, 0
    %v237 = vcvt.s32.f32 %v205
    %v238 = vcvt.s32.f32 %v206
    %v239 = vcvt.s32.f32 %v207
    %v240 = vcvt.s32.f32 %v208
    %v241 = vcvt.s32.f32 %v209
    %v242 = vcvt.s32.f32 %v210
    %v243 = vcvt.s32.f32 %v211
    %v244 = vcvt.s32.f32 %v212
    %v245 = vcvt.s32.f32 %v213
    %v246 = vcvt.s32.f32 %v214
    %v247 = vcvt.s32.f32 %v215
    %v248 = vcvt.s32.f32 %v216
    %v249 = vcvt.s32.f32 %v217
    %v250 = vcvt.s32.f32 %v218
    %v251 = vcvt.s32.f32 %v219
    %v252 = vcvt.s32.f32 %v220
    %v253 = vcvt.s32.f32 %v221
    %v254 = vcvt.s32.f32 %v222
    %v255 = vcvt.s32.f32 %v223
    %v256 = vcvt.s32.f32 %v224
    %v257 = vcvt.s32.f32 %v225
    %v258 = vcvt.s32.f32 %v226
    %v259 = vcvt.s32.f32 %v227
    %v260 = vcvt.s32.f32 %v228
    %v261 = vcvt.s32.f32 %v229
    %v262 = vcvt.s32.f32 %v230
    %v263 = vcvt.s32.f32 %v231
    %v264 = vcvt.s32.f32 %v232
    %v265 = vcvt.s32.f32 %v233
    %v266 = vcvt.s32.f32 %v234
    %v267 = vcvt.s32.f32 %v235
    %v268 = vcvt.s32.f32 %v236
    %v269 = vld [vmem:[%s3] sm:$0xff]
    %v270 = vld [vmem:[%s3 + $0x8] sm:$0xff]
    %v271 = vld [vmem:[%s3 + $0x10] sm:$0xff]
    %v272 = vld [vmem:[%s3 + $0x18] sm:$0xff]
    %v273 = vld [vmem:[%s1] sm:$0xff]
    %v274 = vld [vmem:[%s1 + $0x8] sm:$0xff]
    %v275 = vld [vmem:[%s1 + $0x10] sm:$0xff]
    %v276 = vld [vmem:[%s1 + $0x18] sm:$0xff]
    %v277 = vld [vmem:[%s1 + $0x20] sm:$0xff]
    %v278 = vld [vmem:[%s1 + $0x28] sm:$0xff]
    %v279 = vld [vmem:[%s1 + $0x30] sm:$0xff]
    %v280 = vld [vmem:[%s1 + $0x38] sm:$0xff]
    %v281 = vld [vmem:[%s1 + $0x40] sm:$0xff]
    %v282 = vld [vmem:[%s1 + $0x48] sm:$0xff]
    %v283 = vld [vmem:[%s1 + $0x50] sm:$0xff]
    %v284 = vld [vmem:[%s1 + $0x58] sm:$0xff]
    %v285 = vld [vmem:[%s1 + $0x60] sm:$0xff]
    %v286 = vld [vmem:[%s1 + $0x68] sm:$0xff]
    %v287 = vld [vmem:[%s1 + $0x70] sm:$0xff]
    %v288 = vld [vmem:[%s1 + $0x78] sm:$0xff]
    %v289 = vld [vmem:[%s1 + $0x80] sm:$0xff]
    %v290 = vld [vmem:[%s1 + $0x88] sm:$0xff]
    %v291 = vld [vmem:[%s1 + $0x90] sm:$0xff]
    %v292 = vld [vmem:[%s1 + $0x98] sm:$0xff]
    %v293 = vld [vmem:[%s1 + $0xa0] sm:$0xff]
    %v294 = vld [vmem:[%s1 + $0xa8] sm:$0xff]
    %v295 = vld [vmem:[%s1 + $0xb0] sm:$0xff]
    %v296 = vld [vmem:[%s1 + $0xb8] sm:$0xff]
    %v297 = vld [vmem:[%s1 + $0xc0] sm:$0xff]
    %v298 = vld [vmem:[%s1 + $0xc8] sm:$0xff]
    %v299 = vld [vmem:[%s1 + $0xd0] sm:$0xff]
    %v300 = vld [vmem:[%s1 + $0xd8] sm:$0xff]
    %v301 = vld [vmem:[%s1 + $0xe0] sm:$0xff]
    %v302 = vld [vmem:[%s1 + $0xe8] sm:$0xff]
    %v303 = vld [vmem:[%s1 + $0xf0] sm:$0xff]
    %v304 = vld [vmem:[%s1 + $0xf8] sm:$0xff]
    %v305 = vld [vmem:[%s2] sm:$0xff]
    %307 = vset.pattern.permute.xlu0 0
    %308 = vperm.xlu0 %307, %v273
    %v309 = vpop.permute.xlu0 %308
    %312 = vset.pattern.permute.xlu0 0
    %313 = vperm.xlu0 %312, %v274
    %v314 = vpop.permute.xlu0 %313
    %317 = vset.pattern.permute.xlu0 0
    %318 = vperm.xlu0 %317, %v275
    %v319 = vpop.permute.xlu0 %318
    %322 = vset.pattern.permute.xlu0 0
    %323 = vperm.xlu0 %322, %v276
    %v324 = vpop.permute.xlu0 %323
    %327 = vset.pattern.permute.xlu0 0
    %328 = vperm.xlu0 %327, %v277
    %v329 = vpop.permute.xlu0 %328
    %332 = vset.pattern.permute.xlu0 0
    %333 = vperm.xlu0 %332, %v278
    %v334 = vpop.permute.xlu0 %333
    %337 = vset.pattern.permute.xlu0 0
    %338 = vperm.xlu0 %337, %v279
    %v339 = vpop.permute.xlu0 %338
    %342 = vset.pattern.permute.xlu0 0
    %343 = vperm.xlu0 %342, %v280
    %v344 = vpop.permute.xlu0 %343
    %347 = vset.pattern.permute.xlu0 0
    %348 = vperm.xlu0 %347, %v281
    %v349 = vpop.permute.xlu0 %348
    %352 = vset.pattern.permute.xlu0 0
    %353 = vperm.xlu0 %352, %v282
    %v354 = vpop.permute.xlu0 %353
    %357 = vset.pattern.permute.xlu0 0
    %358 = vperm.xlu0 %357, %v283
    %v359 = vpop.permute.xlu0 %358
    %362 = vset.pattern.permute.xlu0 0
    %363 = vperm.xlu0 %362, %v284
    %v364 = vpop.permute.xlu0 %363
    %367 = vset.pattern.permute.xlu0 0
    %368 = vperm.xlu0 %367, %v285
    %v369 = vpop.permute.xlu0 %368
    %372 = vset.pattern.permute.xlu0 0
    %373 = vperm.xlu0 %372, %v286
    %v374 = vpop.permute.xlu0 %373
    %377 = vset.pattern.permute.xlu0 0
    %378 = vperm.xlu0 %377, %v287
    %v379 = vpop.permute.xlu0 %378
    %382 = vset.pattern.permute.xlu0 0
    %383 = vperm.xlu0 %382, %v288
    %v384 = vpop.permute.xlu0 %383
    %387 = vset.pattern.permute.xlu0 0
    %388 = vperm.xlu0 %387, %v289
    %v389 = vpop.permute.xlu0 %388
    %392 = vset.pattern.permute.xlu0 0
    %393 = vperm.xlu0 %392, %v290
    %v394 = vpop.permute.xlu0 %393
    %397 = vset.pattern.permute.xlu0 0
    %398 = vperm.xlu0 %397, %v291
    %v399 = vpop.permute.xlu0 %398
    %402 = vset.pattern.permute.xlu0 0
    %403 = vperm.xlu0 %402, %v292
    %v404 = vpop.permute.xlu0 %403
    %407 = vset.pattern.permute.xlu0 0
    %408 = vperm.xlu0 %407, %v293
    %v409 = vpop.permute.xlu0 %408
    %412 = vset.pattern.permute.xlu0 0
    %413 = vperm.xlu0 %412, %v294
    %v414 = vpop.permute.xlu0 %413
    %417 = vset.pattern.permute.xlu0 0
    %418 = vperm.xlu0 %417, %v295
    %v419 = vpop.permute.xlu0 %418
    %422 = vset.pattern.permute.xlu0 0
    %423 = vperm.xlu0 %422, %v296
    %v424 = vpop.permute.xlu0 %423
    %427 = vset.pattern.permute.xlu0 0
    %428 = vperm.xlu0 %427, %v297
    %v429 = vpop.permute.xlu0 %428
    %432 = vset.pattern.permute.xlu0 0
    %433 = vperm.xlu0 %432, %v298
    %v434 = vpop.permute.xlu0 %433
    %437 = vset.pattern.permute.xlu0 0
    %438 = vperm.xlu0 %437, %v299
    %v439 = vpop.permute.xlu0 %438
    %442 = vset.pattern.permute.xlu0 0
    %443 = vperm.xlu0 %442, %v300
    %v444 = vpop.permute.xlu0 %443
    %447 = vset.pattern.permute.xlu0 0
    %448 = vperm.xlu0 %447, %v301
    %v449 = vpop.permute.xlu0 %448
    %452 = vset.pattern.permute.xlu0 0
    %453 = vperm.xlu0 %452, %v302
    %v454 = vpop.permute.xlu0 %453
    %457 = vset.pattern.permute.xlu0 0
    %458 = vperm.xlu0 %457, %v303
    %v459 = vpop.permute.xlu0 %458
    %462 = vset.pattern.permute.xlu0 0
    %463 = vperm.xlu0 %462, %v304
    %v464 = vpop.permute.xlu0 %463
    %v467 = vlaneseq
    %v468 = vshrl.u32 %v467, 7
    %v469 = vsub.s32 0, %v468
    %v470 = vrot.slane %v305, %v469
    %v471 = vlaneseq
    %v472 = vshrl.u32 %v471, 7
    %v473 = vsub.s32 2, %v472
    %v474 = vrot.slane %v305, %v473
    %v475 = vlaneseq
    %v476 = vshrl.u32 %v475, 7
    %v477 = vsub.s32 4, %v476
    %v478 = vrot.slane %v305, %v477
    %v479 = vlaneseq
    %v480 = vshrl.u32 %v479, 7
    %v481 = vsub.s32 6, %v480
    %v482 = vrot.slane %v305, %v481
    %v487 = vlaneseq
    %v488 = vshrl.u32 %v487, 7
    %v489 = vsub.s32 0, %v488
    %v490 = vrot.slane %v470, %v489
    %v491 = vlaneseq
    %v492 = vshrl.u32 %v491, 7
    %v493 = vsub.s32 0, %v492
    %v494 = vrot.slane %v474, %v493
    %v495 = vlaneseq
    %v496 = vshrl.u32 %v495, 7
    %v497 = vsub.s32 0, %v496
    %v498 = vrot.slane %v478, %v497
    %v499 = vlaneseq
    %v500 = vshrl.u32 %v499, 7
    %v501 = vsub.s32 0, %v500
    %v502 = vrot.slane %v482, %v501
    %v503 = vmul.f32 %v309, %v490
    %v504 = vmul.f32 %v309, %v494
    %v505 = vmul.f32 %v309, %v498
    %v506 = vmul.f32 %v309, %v502
    %v507 = vmul.f32 %v314, %v490
    %v508 = vmul.f32 %v314, %v494
    %v509 = vmul.f32 %v314, %v498
    %v510 = vmul.f32 %v314, %v502
    %v511 = vmul.f32 %v319, %v490
    %v512 = vmul.f32 %v319, %v494
    %v513 = vmul.f32 %v319, %v498
    %v514 = vmul.f32 %v319, %v502
    %v515 = vmul.f32 %v324, %v490
    %v516 = vmul.f32 %v324, %v494
    %v517 = vmul.f32 %v324, %v498
    %v518 = vmul.f32 %v324, %v502
    %v519 = vmul.f32 %v329, %v490
    %v520 = vmul.f32 %v329, %v494
    %v521 = vmul.f32 %v329, %v498
    %v522 = vmul.f32 %v329, %v502
    %v523 = vmul.f32 %v334, %v490
    %v524 = vmul.f32 %v334, %v494
    %v525 = vmul.f32 %v334, %v498
    %v526 = vmul.f32 %v334, %v502
    %v527 = vmul.f32 %v339, %v490
    %v528 = vmul.f32 %v339, %v494
    %v529 = vmul.f32 %v339, %v498
    %v530 = vmul.f32 %v339, %v502
    %v531 = vmul.f32 %v344, %v490
    %v532 = vmul.f32 %v344, %v494
    %v533 = vmul.f32 %v344, %v498
    %v534 = vmul.f32 %v344, %v502
    %v535 = vmul.f32 %v349, %v490
    %v536 = vmul.f32 %v349, %v494
    %v537 = vmul.f32 %v349, %v498
    %v538 = vmul.f32 %v349, %v502
    %v539 = vmul.f32 %v354, %v490
    %v540 = vmul.f32 %v354, %v494
    %v541 = vmul.f32 %v354, %v498
    %v542 = vmul.f32 %v354, %v502
    %v543 = vmul.f32 %v359, %v490
    %v544 = vmul.f32 %v359, %v494
    %v545 = vmul.f32 %v359, %v498
    %v546 = vmul.f32 %v359, %v502
    %v547 = vmul.f32 %v364, %v490
    %v548 = vmul.f32 %v364, %v494
    %v549 = vmul.f32 %v364, %v498
    %v550 = vmul.f32 %v364, %v502
    %v551 = vmul.f32 %v369, %v490
    %v552 = vmul.f32 %v369, %v494
    %v553 = vmul.f32 %v369, %v498
    %v554 = vmul.f32 %v369, %v502
    %v555 = vmul.f32 %v374, %v490
    %v556 = vmul.f32 %v374, %v494
    %v557 = vmul.f32 %v374, %v498
    %v558 = vmul.f32 %v374, %v502
    %v559 = vmul.f32 %v379, %v490
    %v560 = vmul.f32 %v379, %v494
    %v561 = vmul.f32 %v379, %v498
    %v562 = vmul.f32 %v379, %v502
    %v563 = vmul.f32 %v384, %v490
    %v564 = vmul.f32 %v384, %v494
    %v565 = vmul.f32 %v384, %v498
    %v566 = vmul.f32 %v384, %v502
    %v567 = vmul.f32 %v389, %v490
    %v568 = vmul.f32 %v389, %v494
    %v569 = vmul.f32 %v389, %v498
    %v570 = vmul.f32 %v389, %v502
    %v571 = vmul.f32 %v394, %v490
    %v572 = vmul.f32 %v394, %v494
    %v573 = vmul.f32 %v394, %v498
    %v574 = vmul.f32 %v394, %v502
    %v575 = vmul.f32 %v399, %v490
    %v576 = vmul.f32 %v399, %v494
    %v577 = vmul.f32 %v399, %v498
    %v578 = vmul.f32 %v399, %v502
    %v579 = vmul.f32 %v404, %v490
    %v580 = vmul.f32 %v404, %v494
    %v581 = vmul.f32 %v404, %v498
    %v582 = vmul.f32 %v404, %v502
    %v583 = vmul.f32 %v409, %v490
    %v584 = vmul.f32 %v409, %v494
    %v585 = vmul.f32 %v409, %v498
    %v586 = vmul.f32 %v409, %v502
    %v587 = vmul.f32 %v414, %v490
    %v588 = vmul.f32 %v414, %v494
    %v589 = vmul.f32 %v414, %v498
    %v590 = vmul.f32 %v414, %v502
    %v591 = vmul.f32 %v419, %v490
    %v592 = vmul.f32 %v419, %v494
    %v593 = vmul.f32 %v419, %v498
    %v594 = vmul.f32 %v419, %v502
    %v595 = vmul.f32 %v424, %v490
    %v596 = vmul.f32 %v424, %v494
    %v597 = vmul.f32 %v424, %v498
    %v598 = vmul.f32 %v424, %v502
    %v599 = vmul.f32 %v429, %v490
    %v600 = vmul.f32 %v429, %v494
    %v601 = vmul.f32 %v429, %v498
    %v602 = vmul.f32 %v429, %v502
    %v603 = vmul.f32 %v434, %v490
    %v604 = vmul.f32 %v434, %v494
    %v605 = vmul.f32 %v434, %v498
    %v606 = vmul.f32 %v434, %v502
    %v607 = vmul.f32 %v439, %v490
    %v608 = vmul.f32 %v439, %v494
    %v609 = vmul.f32 %v439, %v498
    %v610 = vmul.f32 %v439, %v502
    %v611 = vmul.f32 %v444, %v490
    %v612 = vmul.f32 %v444, %v494
    %v613 = vmul.f32 %v444, %v498
    %v614 = vmul.f32 %v444, %v502
    %v615 = vmul.f32 %v449, %v490
    %v616 = vmul.f32 %v449, %v494
    %v617 = vmul.f32 %v449, %v498
    %v618 = vmul.f32 %v449, %v502
    %v619 = vmul.f32 %v454, %v490
    %v620 = vmul.f32 %v454, %v494
    %v621 = vmul.f32 %v454, %v498
    %v622 = vmul.f32 %v454, %v502
    %v623 = vmul.f32 %v459, %v490
    %v624 = vmul.f32 %v459, %v494
    %v625 = vmul.f32 %v459, %v498
    %v626 = vmul.f32 %v459, %v502
    %v627 = vmul.f32 %v464, %v490
    %v628 = vmul.f32 %v464, %v494
    %v629 = vmul.f32 %v464, %v498
    %v630 = vmul.f32 %v464, %v502
    %vm631 = vcmask 64512
    %v633 = vsel %vm631, %v237, 0
    %v636 = vsel %vm631, %v238, 0
    %v639 = vsel %vm631, %v239, 0
    %v642 = vsel %vm631, %v240, 0
    %v645 = vsel %vm631, %v241, 0
    %v648 = vsel %vm631, %v242, 0
    %v651 = vsel %vm631, %v243, 0
    %v654 = vsel %vm631, %v244, 0
    %v657 = vsel %vm631, %v245, 0
    %v660 = vsel %vm631, %v246, 0
    %v663 = vsel %vm631, %v247, 0
    %v666 = vsel %vm631, %v248, 0
    %v669 = vsel %vm631, %v249, 0
    %v672 = vsel %vm631, %v250, 0
    %v675 = vsel %vm631, %v251, 0
    %v678 = vsel %vm631, %v252, 0
    %v681 = vsel %vm631, %v253, 0
    %v684 = vsel %vm631, %v254, 0
    %v687 = vsel %vm631, %v255, 0
    %v690 = vsel %vm631, %v256, 0
    %v693 = vsel %vm631, %v257, 0
    %v696 = vsel %vm631, %v258, 0
    %v699 = vsel %vm631, %v259, 0
    %v702 = vsel %vm631, %v260, 0
    %v705 = vsel %vm631, %v261, 0
    %v708 = vsel %vm631, %v262, 0
    %v711 = vsel %vm631, %v263, 0
    %v714 = vsel %vm631, %v264, 0
    %v717 = vsel %vm631, %v265, 0
    %v720 = vsel %vm631, %v266, 0
    %v723 = vsel %vm631, %v267, 0
    %v726 = vsel %vm631, %v268, 0
    %728 = vmatprep.subr.mxu0 0.0
    %729 = vmatpush1.msra.mxu0 0.0
    %730 = vmatprep.subr.mxu0 0.0
    %731 = vmatpush1.msra.mxu0 0.0
    %732 = vmatprep.subr.mxu0 0.0
    %733 = vmatpush1.msra.mxu0 0.0
    %734 = vmatprep.subr.mxu0 0.0
    %735 = vmatpush1.msra.mxu0 0.0
    %736 = vmatprep.subr.mxu0 0.0
    %737 = vmatpush1.msra.mxu0 0.0
    %738 = vmatprep.subr.mxu0 0.0
    %739 = vmatpush1.msra.mxu0 0.0
    %740 = vmatprep.subr.mxu0 0.0
    %741 = vmatpush1.msra.mxu0 0.0
    %742 = vmatprep.subr.mxu0 0.0
    %743 = vmatpush1.msra.mxu0 0.0
    %744 = vmatprep.subr.mxu0 0.0
    %745 = vmatpush1.msra.mxu0 0.0
    %746 = vmatprep.subr.mxu0 0.0
    %747 = vmatpush1.msra.mxu0 0.0
    %748 = vmatprep.subr.mxu0 0.0
    %749 = vmatpush1.msra.mxu0 0.0
    %750 = vmatprep.subr.mxu0 0.0
    %751 = vmatpush1.msra.mxu0 0.0
    %752 = vmatprep.subr.mxu0 0.0
    %753 = vmatpush1.msra.mxu0 0.0
    %754 = vmatprep.subr.mxu0 0.0
    %755 = vmatpush1.msra.mxu0 0.0
    %756 = vmatprep.subr.mxu0 0.0
    %757 = vmatpush1.msra.mxu0 0.0
    %758 = vmatprep.subr.mxu0 %v270
    %759 = vmatpush1.msra.mxu0 %v269
    %760 = vmatprep.subr.mxu0 0.0
    %761 = vmatpush2.msra.mxu0 0.0
    %762 = vmatprep.subr.mxu0 0.0
    %763 = vmatpush2.msra.mxu0 0.0
    %764 = vmatprep.subr.mxu0 0.0
    %765 = vmatpush2.msra.mxu0 0.0
    %766 = vmatprep.subr.mxu0 0.0
    %767 = vmatpush2.msra.mxu0 0.0
    %768 = vmatprep.subr.mxu0 0.0
    %769 = vmatpush2.msra.mxu0 0.0
    %770 = vmatprep.subr.mxu0 0.0
    %771 = vmatpush2.msra.mxu0 0.0
    %772 = vmatprep.subr.mxu0 0.0
    %773 = vmatpush2.msra.mxu0 0.0
    %774 = vmatprep.subr.mxu0 0.0
    %775 = vmatpush2.msra.mxu0 0.0
    %776 = vmatprep.subr.mxu0 0.0
    %777 = vmatpush2.msra.mxu0 0.0
    %778 = vmatprep.subr.mxu0 0.0
    %779 = vmatpush2.msra.mxu0 0.0
    %780 = vmatprep.subr.mxu0 0.0
    %781 = vmatpush2.msra.mxu0 0.0
    %782 = vmatprep.subr.mxu0 0.0
    %783 = vmatpush2.msra.mxu0 0.0
    %784 = vmatprep.subr.mxu0 0.0
    %785 = vmatpush2.msra.mxu0 0.0
    %786 = vmatprep.subr.mxu0 0.0
    %787 = vmatpush2.msra.mxu0 0.0
    %788 = vmatprep.subr.mxu0 0.0
    %789 = vmatpush2.msra.mxu0 0.0
    %790 = vmatprep.subr.mxu0 0.0
    %791 = vmatpush2.msra.mxu0 0.0
    %792 = vmatprep.mubr.f32.mxu0 0.0
    %793 = vmatmul.mubr.f32.gmra.mxu0 %v633
    %v794 = vpop.f32.mrf.mxu0
    %v795 = vadd.f32 %v503, %v794
    %v796 = vpop.f32.mrf.mxu0
    %v797 = vadd.f32 %v504, %v796
    %798 = vmatprep.mubr.f32.mxu0 0.0
    %799 = vmatmul.mubr.f32.gmra.mxu0 %v636
    %v800 = vpop.f32.mrf.mxu0
    %v801 = vadd.f32 %v507, %v800
    %v802 = vpop.f32.mrf.mxu0
    %v803 = vadd.f32 %v508, %v802
    %804 = vmatprep.mubr.f32.mxu0 0.0
    %805 = vmatmul.mubr.f32.gmra.mxu0 %v639
    %v806 = vpop.f32.mrf.mxu0
    %v807 = vadd.f32 %v511, %v806
    %v808 = vpop.f32.mrf.mxu0
    %v809 = vadd.f32 %v512, %v808
    %810 = vmatprep.mubr.f32.mxu0 0.0
    %811 = vmatmul.mubr.f32.gmra.mxu0 %v642
    %v812 = vpop.f32.mrf.mxu0
    %v813 = vadd.f32 %v515, %v812
    %v814 = vpop.f32.mrf.mxu0
    %v815 = vadd.f32 %v516, %v814
    %816 = vmatprep.mubr.f32.mxu0 0.0
    %817 = vmatmul.mubr.f32.gmra.mxu0 %v645
    %v818 = vpop.f32.mrf.mxu0
    %v819 = vadd.f32 %v519, %v818
    %v820 = vpop.f32.mrf.mxu0
    %v821 = vadd.f32 %v520, %v820
    %822 = vmatprep.mubr.f32.mxu0 0.0
    %823 = vmatmul.mubr.f32.gmra.mxu0 %v648
    %v824 = vpop.f32.mrf.mxu0
    %v825 = vadd.f32 %v523, %v824
    %v826 = vpop.f32.mrf.mxu0
    %v827 = vadd.f32 %v524, %v826
    %828 = vmatprep.mubr.f32.mxu0 0.0
    %829 = vmatmul.mubr.f32.gmra.mxu0 %v651
    %v830 = vpop.f32.mrf.mxu0
    %v831 = vadd.f32 %v527, %v830
    %v832 = vpop.f32.mrf.mxu0
    %v833 = vadd.f32 %v528, %v832
    %834 = vmatprep.mubr.f32.mxu0 0.0
    %835 = vmatmul.mubr.f32.gmra.mxu0 %v654
    %v836 = vpop.f32.mrf.mxu0
    %v837 = vadd.f32 %v531, %v836
    %v838 = vpop.f32.mrf.mxu0
    %v839 = vadd.f32 %v532, %v838
    %840 = vmatprep.mubr.f32.mxu0 0.0
    %841 = vmatmul.mubr.f32.gmra.mxu0 %v657
    %v842 = vpop.f32.mrf.mxu0
    %v843 = vadd.f32 %v535, %v842
    %v844 = vpop.f32.mrf.mxu0
    %v845 = vadd.f32 %v536, %v844
    %846 = vmatprep.mubr.f32.mxu0 0.0
    %847 = vmatmul.mubr.f32.gmra.mxu0 %v660
    %v848 = vpop.f32.mrf.mxu0
    %v849 = vadd.f32 %v539, %v848
    %v850 = vpop.f32.mrf.mxu0
    %v851 = vadd.f32 %v540, %v850
    %852 = vmatprep.mubr.f32.mxu0 0.0
    %853 = vmatmul.mubr.f32.gmra.mxu0 %v663
    %v854 = vpop.f32.mrf.mxu0
    %v855 = vadd.f32 %v543, %v854
    %v856 = vpop.f32.mrf.mxu0
    %v857 = vadd.f32 %v544, %v856
    %858 = vmatprep.mubr.f32.mxu0 0.0
    %859 = vmatmul.mubr.f32.gmra.mxu0 %v666
    %v860 = vpop.f32.mrf.mxu0
    %v861 = vadd.f32 %v547, %v860
    %v862 = vpop.f32.mrf.mxu0
    %v863 = vadd.f32 %v548, %v862
    %864 = vmatprep.mubr.f32.mxu0 0.0
    %865 = vmatmul.mubr.f32.gmra.mxu0 %v669
    %v866 = vpop.f32.mrf.mxu0
    %v867 = vadd.f32 %v551, %v866
    %v868 = vpop.f32.mrf.mxu0
    %v869 = vadd.f32 %v552, %v868
    %870 = vmatprep.mubr.f32.mxu0 0.0
    %871 = vmatmul.mubr.f32.gmra.mxu0 %v672
    %v872 = vpop.f32.mrf.mxu0
    %v873 = vadd.f32 %v555, %v872
    %v874 = vpop.f32.mrf.mxu0
    %v875 = vadd.f32 %v556, %v874
    %876 = vmatprep.mubr.f32.mxu0 0.0
    %877 = vmatmul.mubr.f32.gmra.mxu0 %v675
    %v878 = vpop.f32.mrf.mxu0
    %v879 = vadd.f32 %v559, %v878
    %v880 = vpop.f32.mrf.mxu0
    %v881 = vadd.f32 %v560, %v880
    %882 = vmatprep.mubr.f32.mxu0 0.0
    %883 = vmatmul.mubr.f32.gmra.mxu0 %v678
    %v884 = vpop.f32.mrf.mxu0
    %v885 = vadd.f32 %v563, %v884
    %v886 = vpop.f32.mrf.mxu0
    %v887 = vadd.f32 %v564, %v886
    %888 = vmatprep.mubr.f32.mxu0 0.0
    %889 = vmatmul.mubr.f32.gmra.mxu0 %v681
    %v890 = vpop.f32.mrf.mxu0
    %v891 = vadd.f32 %v567, %v890
    %v892 = vpop.f32.mrf.mxu0
    %v893 = vadd.f32 %v568, %v892
    %894 = vmatprep.mubr.f32.mxu0 0.0
    %895 = vmatmul.mubr.f32.gmra.mxu0 %v684
    %v896 = vpop.f32.mrf.mxu0
    %v897 = vadd.f32 %v571, %v896
    %v898 = vpop.f32.mrf.mxu0
    %v899 = vadd.f32 %v572, %v898
    %900 = vmatprep.mubr.f32.mxu0 0.0
    %901 = vmatmul.mubr.f32.gmra.mxu0 %v687
    %v902 = vpop.f32.mrf.mxu0
    %v903 = vadd.f32 %v575, %v902
    %v904 = vpop.f32.mrf.mxu0
    %v905 = vadd.f32 %v576, %v904
    %906 = vmatprep.mubr.f32.mxu0 0.0
    %907 = vmatmul.mubr.f32.gmra.mxu0 %v690
    %v908 = vpop.f32.mrf.mxu0
    %v909 = vadd.f32 %v579, %v908
    %v910 = vpop.f32.mrf.mxu0
    %v911 = vadd.f32 %v580, %v910
    %912 = vmatprep.mubr.f32.mxu0 0.0
    %913 = vmatmul.mubr.f32.gmra.mxu0 %v693
    %v914 = vpop.f32.mrf.mxu0
    %v915 = vadd.f32 %v583, %v914
    %v916 = vpop.f32.mrf.mxu0
    %v917 = vadd.f32 %v584, %v916
    %918 = vmatprep.mubr.f32.mxu0 0.0
    %919 = vmatmul.mubr.f32.gmra.mxu0 %v696
    %v920 = vpop.f32.mrf.mxu0
    %v921 = vadd.f32 %v587, %v920
    %v922 = vpop.f32.mrf.mxu0
    %v923 = vadd.f32 %v588, %v922
    %924 = vmatprep.mubr.f32.mxu0 0.0
    %925 = vmatmul.mubr.f32.gmra.mxu0 %v699
    %v926 = vpop.f32.mrf.mxu0
    %v927 = vadd.f32 %v591, %v926
    %v928 = vpop.f32.mrf.mxu0
    %v929 = vadd.f32 %v592, %v928
    %930 = vmatprep.mubr.f32.mxu0 0.0
    %931 = vmatmul.mubr.f32.gmra.mxu0 %v702
    %v932 = vpop.f32.mrf.mxu0
    %v933 = vadd.f32 %v595, %v932
    %v934 = vpop.f32.mrf.mxu0
    %v935 = vadd.f32 %v596, %v934
    %936 = vmatprep.mubr.f32.mxu0 0.0
    %937 = vmatmul.mubr.f32.gmra.mxu0 %v705
    %v938 = vpop.f32.mrf.mxu0
    %v939 = vadd.f32 %v599, %v938
    %v940 = vpop.f32.mrf.mxu0
    %v941 = vadd.f32 %v600, %v940
    %942 = vmatprep.mubr.f32.mxu0 0.0
    %943 = vmatmul.mubr.f32.gmra.mxu0 %v708
    %v944 = vpop.f32.mrf.mxu0
    %v945 = vadd.f32 %v603, %v944
    %v946 = vpop.f32.mrf.mxu0
    %v947 = vadd.f32 %v604, %v946
    %948 = vmatprep.mubr.f32.mxu0 0.0
    %949 = vmatmul.mubr.f32.gmra.mxu0 %v711
    %v950 = vpop.f32.mrf.mxu0
    %v951 = vadd.f32 %v607, %v950
    %v952 = vpop.f32.mrf.mxu0
    %v953 = vadd.f32 %v608, %v952
    %954 = vmatprep.mubr.f32.mxu0 0.0
    %955 = vmatmul.mubr.f32.gmra.mxu0 %v714
    %v956 = vpop.f32.mrf.mxu0
    %v957 = vadd.f32 %v611, %v956
    %v958 = vpop.f32.mrf.mxu0
    %v959 = vadd.f32 %v612, %v958
    %960 = vmatprep.mubr.f32.mxu0 0.0
    %961 = vmatmul.mubr.f32.gmra.mxu0 %v717
    %v962 = vpop.f32.mrf.mxu0
    %v963 = vadd.f32 %v615, %v962
    %v964 = vpop.f32.mrf.mxu0
    %v965 = vadd.f32 %v616, %v964
    %966 = vmatprep.mubr.f32.mxu0 0.0
    %967 = vmatmul.mubr.f32.gmra.mxu0 %v720
    %v968 = vpop.f32.mrf.mxu0
    %v969 = vadd.f32 %v619, %v968
    %v970 = vpop.f32.mrf.mxu0
    %v971 = vadd.f32 %v620, %v970
    %972 = vmatprep.mubr.f32.mxu0 0.0
    %973 = vmatmul.mubr.f32.gmra.mxu0 %v723
    %v974 = vpop.f32.mrf.mxu0
    %v975 = vadd.f32 %v623, %v974
    %v976 = vpop.f32.mrf.mxu0
    %v977 = vadd.f32 %v624, %v976
    %978 = vmatprep.mubr.f32.mxu0 0.0
    %979 = vmatmul.mubr.f32.gmra.mxu0 %v726
    %v980 = vpop.f32.mrf.mxu0
    %v981 = vadd.f32 %v627, %v980
    %v982 = vpop.f32.mrf.mxu0
    %v983 = vadd.f32 %v628, %v982
    %984 = vdwg.mxu0
    %985 = vmatprep.subr.mxu0 0.0
    %986 = vmatpush1.msra.mxu0 0.0
    %987 = vmatprep.subr.mxu0 0.0
    %988 = vmatpush1.msra.mxu0 0.0
    %989 = vmatprep.subr.mxu0 0.0
    %990 = vmatpush1.msra.mxu0 0.0
    %991 = vmatprep.subr.mxu0 0.0
    %992 = vmatpush1.msra.mxu0 0.0
    %993 = vmatprep.subr.mxu0 0.0
    %994 = vmatpush1.msra.mxu0 0.0
    %995 = vmatprep.subr.mxu0 0.0
    %996 = vmatpush1.msra.mxu0 0.0
    %997 = vmatprep.subr.mxu0 0.0
    %998 = vmatpush1.msra.mxu0 0.0
    %999 = vmatprep.subr.mxu0 0.0
    %1000 = vmatpush1.msra.mxu0 0.0
    %1001 = vmatprep.subr.mxu0 0.0
    %1002 = vmatpush1.msra.mxu0 0.0
    %1003 = vmatprep.subr.mxu0 0.0
    %1004 = vmatpush1.msra.mxu0 0.0
    %1005 = vmatprep.subr.mxu0 0.0
    %1006 = vmatpush1.msra.mxu0 0.0
    %1007 = vmatprep.subr.mxu0 0.0
    %1008 = vmatpush1.msra.mxu0 0.0
    %1009 = vmatprep.subr.mxu0 0.0
    %1010 = vmatpush1.msra.mxu0 0.0
    %1011 = vmatprep.subr.mxu0 0.0
    %1012 = vmatpush1.msra.mxu0 0.0
    %1013 = vmatprep.subr.mxu0 0.0
    %1014 = vmatpush1.msra.mxu0 0.0
    %1015 = vmatprep.subr.mxu0 %v272
    %1016 = vmatpush1.msra.mxu0 %v271
    %1017 = vmatprep.subr.mxu0 0.0
    %1018 = vmatpush2.msra.mxu0 0.0
    %1019 = vmatprep.subr.mxu0 0.0
    %1020 = vmatpush2.msra.mxu0 0.0
    %1021 = vmatprep.subr.mxu0 0.0
    %1022 = vmatpush2.msra.mxu0 0.0
    %1023 = vmatprep.subr.mxu0 0.0
    %1024 = vmatpush2.msra.mxu0 0.0
    %1025 = vmatprep.subr.mxu0 0.0
    %1026 = vmatpush2.msra.mxu0 0.0
    %1027 = vmatprep.subr.mxu0 0.0
    %1028 = vmatpush2.msra.mxu0 0.0
    %1029 = vmatprep.subr.mxu0 0.0
    %1030 = vmatpush2.msra.mxu0 0.0
    %1031 = vmatprep.subr.mxu0 0.0
    %1032 = vmatpush2.msra.mxu0 0.0
    %1033 = vmatprep.subr.mxu0 0.0
    %1034 = vmatpush2.msra.mxu0 0.0
    %1035 = vmatprep.subr.mxu0 0.0
    %1036 = vmatpush2.msra.mxu0 0.0
    %1037 = vmatprep.subr.mxu0 0.0
    %1038 = vmatpush2.msra.mxu0 0.0
    %1039 = vmatprep.subr.mxu0 0.0
    %1040 = vmatpush2.msra.mxu0 0.0
    %1041 = vmatprep.subr.mxu0 0.0
    %1042 = vmatpush2.msra.mxu0 0.0
    %1043 = vmatprep.subr.mxu0 0.0
    %1044 = vmatpush2.msra.mxu0 0.0
    %1045 = vmatprep.subr.mxu0 0.0
    %1046 = vmatpush2.msra.mxu0 0.0
    %1047 = vmatprep.subr.mxu0 0.0
    %1048 = vmatpush2.msra.mxu0 0.0
    %1049 = vmatprep.mubr.f32.mxu0 0.0
    %1050 = vmatmul.mubr.f32.gmra.mxu0 %v633
    %v1051 = vpop.f32.mrf.mxu0
    %v1052 = vadd.f32 %v505, %v1051
    %v1053 = vpop.f32.mrf.mxu0
    %v1054 = vadd.f32 %v506, %v1053
    %1055 = vmatprep.mubr.f32.mxu0 0.0
    %1056 = vmatmul.mubr.f32.gmra.mxu0 %v636
    %v1057 = vpop.f32.mrf.mxu0
    %v1058 = vadd.f32 %v509, %v1057
    %v1059 = vpop.f32.mrf.mxu0
    %v1060 = vadd.f32 %v510, %v1059
    %1061 = vmatprep.mubr.f32.mxu0 0.0
    %1062 = vmatmul.mubr.f32.gmra.mxu0 %v639
    %v1063 = vpop.f32.mrf.mxu0
    %v1064 = vadd.f32 %v513, %v1063
    %v1065 = vpop.f32.mrf.mxu0
    %v1066 = vadd.f32 %v514, %v1065
    %1067 = vmatprep.mubr.f32.mxu0 0.0
    %1068 = vmatmul.mubr.f32.gmra.mxu0 %v642
    %v1069 = vpop.f32.mrf.mxu0
    %v1070 = vadd.f32 %v517, %v1069
    %v1071 = vpop.f32.mrf.mxu0
    %v1072 = vadd.f32 %v518, %v1071
    %1073 = vmatprep.mubr.f32.mxu0 0.0
    %1074 = vmatmul.mubr.f32.gmra.mxu0 %v645
    %v1075 = vpop.f32.mrf.mxu0
    %v1076 = vadd.f32 %v521, %v1075
    %v1077 = vpop.f32.mrf.mxu0
    %v1078 = vadd.f32 %v522, %v1077
    %1079 = vmatprep.mubr.f32.mxu0 0.0
    %1080 = vmatmul.mubr.f32.gmra.mxu0 %v648
    %v1081 = vpop.f32.mrf.mxu0
    %v1082 = vadd.f32 %v525, %v1081
    %v1083 = vpop.f32.mrf.mxu0
    %v1084 = vadd.f32 %v526, %v1083
    %1085 = vmatprep.mubr.f32.mxu0 0.0
    %1086 = vmatmul.mubr.f32.gmra.mxu0 %v651
    %v1087 = vpop.f32.mrf.mxu0
    %v1088 = vadd.f32 %v529, %v1087
    %v1089 = vpop.f32.mrf.mxu0
    %v1090 = vadd.f32 %v530, %v1089
    %1091 = vmatprep.mubr.f32.mxu0 0.0
    %1092 = vmatmul.mubr.f32.gmra.mxu0 %v654
    %v1093 = vpop.f32.mrf.mxu0
    %v1094 = vadd.f32 %v533, %v1093
    %v1095 = vpop.f32.mrf.mxu0
    %v1096 = vadd.f32 %v534, %v1095
    %1097 = vmatprep.mubr.f32.mxu0 0.0
    %1098 = vmatmul.mubr.f32.gmra.mxu0 %v657
    %v1099 = vpop.f32.mrf.mxu0
    %v1100 = vadd.f32 %v537, %v1099
    %v1101 = vpop.f32.mrf.mxu0
    %v1102 = vadd.f32 %v538, %v1101
    %1103 = vmatprep.mubr.f32.mxu0 0.0
    %1104 = vmatmul.mubr.f32.gmra.mxu0 %v660
    %v1105 = vpop.f32.mrf.mxu0
    %v1106 = vadd.f32 %v541, %v1105
    %v1107 = vpop.f32.mrf.mxu0
    %v1108 = vadd.f32 %v542, %v1107
    %1109 = vmatprep.mubr.f32.mxu0 0.0
    %1110 = vmatmul.mubr.f32.gmra.mxu0 %v663
    %v1111 = vpop.f32.mrf.mxu0
    %v1112 = vadd.f32 %v545, %v1111
    %v1113 = vpop.f32.mrf.mxu0
    %v1114 = vadd.f32 %v546, %v1113
    %1115 = vmatprep.mubr.f32.mxu0 0.0
    %1116 = vmatmul.mubr.f32.gmra.mxu0 %v666
    %v1117 = vpop.f32.mrf.mxu0
    %v1118 = vadd.f32 %v549, %v1117
    %v1119 = vpop.f32.mrf.mxu0
    %v1120 = vadd.f32 %v550, %v1119
    %1121 = vmatprep.mubr.f32.mxu0 0.0
    %1122 = vmatmul.mubr.f32.gmra.mxu0 %v669
    %v1123 = vpop.f32.mrf.mxu0
    %v1124 = vadd.f32 %v553, %v1123
    %v1125 = vpop.f32.mrf.mxu0
    %v1126 = vadd.f32 %v554, %v1125
    %1127 = vmatprep.mubr.f32.mxu0 0.0
    %1128 = vmatmul.mubr.f32.gmra.mxu0 %v672
    %v1129 = vpop.f32.mrf.mxu0
    %v1130 = vadd.f32 %v557, %v1129
    %v1131 = vpop.f32.mrf.mxu0
    %v1132 = vadd.f32 %v558, %v1131
    %1133 = vmatprep.mubr.f32.mxu0 0.0
    %1134 = vmatmul.mubr.f32.gmra.mxu0 %v675
    %v1135 = vpop.f32.mrf.mxu0
    %v1136 = vadd.f32 %v561, %v1135
    %v1137 = vpop.f32.mrf.mxu0
    %v1138 = vadd.f32 %v562, %v1137
    %1139 = vmatprep.mubr.f32.mxu0 0.0
    %1140 = vmatmul.mubr.f32.gmra.mxu0 %v678
    %v1141 = vpop.f32.mrf.mxu0
    %v1142 = vadd.f32 %v565, %v1141
    %v1143 = vpop.f32.mrf.mxu0
    %v1144 = vadd.f32 %v566, %v1143
    %1145 = vmatprep.mubr.f32.mxu0 0.0
    %1146 = vmatmul.mubr.f32.gmra.mxu0 %v681
    %v1147 = vpop.f32.mrf.mxu0
    %v1148 = vadd.f32 %v569, %v1147
    %v1149 = vpop.f32.mrf.mxu0
    %v1150 = vadd.f32 %v570, %v1149
    %1151 = vmatprep.mubr.f32.mxu0 0.0
    %1152 = vmatmul.mubr.f32.gmra.mxu0 %v684
    %v1153 = vpop.f32.mrf.mxu0
    %v1154 = vadd.f32 %v573, %v1153
    %v1155 = vpop.f32.mrf.mxu0
    %v1156 = vadd.f32 %v574, %v1155
    %1157 = vmatprep.mubr.f32.mxu0 0.0
    %1158 = vmatmul.mubr.f32.gmra.mxu0 %v687
    %v1159 = vpop.f32.mrf.mxu0
    %v1160 = vadd.f32 %v577, %v1159
    %v1161 = vpop.f32.mrf.mxu0
    %v1162 = vadd.f32 %v578, %v1161
    %1163 = vmatprep.mubr.f32.mxu0 0.0
    %1164 = vmatmul.mubr.f32.gmra.mxu0 %v690
    %v1165 = vpop.f32.mrf.mxu0
    %v1166 = vadd.f32 %v581, %v1165
    %v1167 = vpop.f32.mrf.mxu0
    %v1168 = vadd.f32 %v582, %v1167
    %1169 = vmatprep.mubr.f32.mxu0 0.0
    %1170 = vmatmul.mubr.f32.gmra.mxu0 %v693
    %v1171 = vpop.f32.mrf.mxu0
    %v1172 = vadd.f32 %v585, %v1171
    %v1173 = vpop.f32.mrf.mxu0
    %v1174 = vadd.f32 %v586, %v1173
    %1175 = vmatprep.mubr.f32.mxu0 0.0
    %1176 = vmatmul.mubr.f32.gmra.mxu0 %v696
    %v1177 = vpop.f32.mrf.mxu0
    %v1178 = vadd.f32 %v589, %v1177
    %v1179 = vpop.f32.mrf.mxu0
    %v1180 = vadd.f32 %v590, %v1179
    %1181 = vmatprep.mubr.f32.mxu0 0.0
    %1182 = vmatmul.mubr.f32.gmra.mxu0 %v699
    %v1183 = vpop.f32.mrf.mxu0
    %v1184 = vadd.f32 %v593, %v1183
    %v1185 = vpop.f32.mrf.mxu0
    %v1186 = vadd.f32 %v594, %v1185
    %1187 = vmatprep.mubr.f32.mxu0 0.0
    %1188 = vmatmul.mubr.f32.gmra.mxu0 %v702
    %v1189 = vpop.f32.mrf.mxu0
    %v1190 = vadd.f32 %v597, %v1189
    %v1191 = vpop.f32.mrf.mxu0
    %v1192 = vadd.f32 %v598, %v1191
    %1193 = vmatprep.mubr.f32.mxu0 0.0
    %1194 = vmatmul.mubr.f32.gmra.mxu0 %v705
    %v1195 = vpop.f32.mrf.mxu0
    %v1196 = vadd.f32 %v601, %v1195
    %v1197 = vpop.f32.mrf.mxu0
    %v1198 = vadd.f32 %v602, %v1197
    %1199 = vmatprep.mubr.f32.mxu0 0.0
    %1200 = vmatmul.mubr.f32.gmra.mxu0 %v708
    %v1201 = vpop.f32.mrf.mxu0
    %v1202 = vadd.f32 %v605, %v1201
    %v1203 = vpop.f32.mrf.mxu0
    %v1204 = vadd.f32 %v606, %v1203
    %1205 = vmatprep.mubr.f32.mxu0 0.0
    %1206 = vmatmul.mubr.f32.gmra.mxu0 %v711
    %v1207 = vpop.f32.mrf.mxu0
    %v1208 = vadd.f32 %v609, %v1207
    %v1209 = vpop.f32.mrf.mxu0
    %v1210 = vadd.f32 %v610, %v1209
    %1211 = vmatprep.mubr.f32.mxu0 0.0
    %1212 = vmatmul.mubr.f32.gmra.mxu0 %v714
    %v1213 = vpop.f32.mrf.mxu0
    %v1214 = vadd.f32 %v613, %v1213
    %v1215 = vpop.f32.mrf.mxu0
    %v1216 = vadd.f32 %v614, %v1215
    %1217 = vmatprep.mubr.f32.mxu0 0.0
    %1218 = vmatmul.mubr.f32.gmra.mxu0 %v717
    %v1219 = vpop.f32.mrf.mxu0
    %v1220 = vadd.f32 %v617, %v1219
    %v1221 = vpop.f32.mrf.mxu0
    %v1222 = vadd.f32 %v618, %v1221
    %1223 = vmatprep.mubr.f32.mxu0 0.0
    %1224 = vmatmul.mubr.f32.gmra.mxu0 %v720
    %v1225 = vpop.f32.mrf.mxu0
    %v1226 = vadd.f32 %v621, %v1225
    %v1227 = vpop.f32.mrf.mxu0
    %v1228 = vadd.f32 %v622, %v1227
    %1229 = vmatprep.mubr.f32.mxu0 0.0
    %1230 = vmatmul.mubr.f32.gmra.mxu0 %v723
    %v1231 = vpop.f32.mrf.mxu0
    %v1232 = vadd.f32 %v625, %v1231
    %v1233 = vpop.f32.mrf.mxu0
    %v1234 = vadd.f32 %v626, %v1233
    %1235 = vmatprep.mubr.f32.mxu0 0.0
    %1236 = vmatmul.mubr.f32.gmra.mxu0 %v726
    %v1237 = vpop.f32.mrf.mxu0
    %v1238 = vadd.f32 %v629, %v1237
    %v1239 = vpop.f32.mrf.mxu0
    %v1240 = vadd.f32 %v630, %v1239
    %1241 = vdwg.mxu0
    %1242 = vset.pattern.permute.xlu0 1
    %1243 = vperm.xlu0 %1242, %v273
    %v1244 = vpop.permute.xlu0 %1243
    %1246 = vset.pattern.permute.xlu0 1
    %1247 = vperm.xlu0 %1246, %v274
    %v1248 = vpop.permute.xlu0 %1247
    %1250 = vset.pattern.permute.xlu0 1
    %1251 = vperm.xlu0 %1250, %v275
    %v1252 = vpop.permute.xlu0 %1251
    %1254 = vset.pattern.permute.xlu0 1
    %1255 = vperm.xlu0 %1254, %v276
    %v1256 = vpop.permute.xlu0 %1255
    %1258 = vset.pattern.permute.xlu0 1
    %1259 = vperm.xlu0 %1258, %v277
    %v1260 = vpop.permute.xlu0 %1259
    %1262 = vset.pattern.permute.xlu0 1
    %1263 = vperm.xlu0 %1262, %v278
    %v1264 = vpop.permute.xlu0 %1263
    %1266 = vset.pattern.permute.xlu0 1
    %1267 = vperm.xlu0 %1266, %v279
    %v1268 = vpop.permute.xlu0 %1267
    %1270 = vset.pattern.permute.xlu0 1
    %1271 = vperm.xlu0 %1270, %v280
    %v1272 = vpop.permute.xlu0 %1271
    %1274 = vset.pattern.permute.xlu0 1
    %1275 = vperm.xlu0 %1274, %v281
    %v1276 = vpop.permute.xlu0 %1275
    %1278 = vset.pattern.permute.xlu0 1
    %1279 = vperm.xlu0 %1278, %v282
    %v1280 = vpop.permute.xlu0 %1279
    %1282 = vset.pattern.permute.xlu0 1
    %1283 = vperm.xlu0 %1282, %v283
    %v1284 = vpop.permute.xlu0 %1283
    %1286 = vset.pattern.permute.xlu0 1
    %1287 = vperm.xlu0 %1286, %v284
    %v1288 = vpop.permute.xlu0 %1287
    %1290 = vset.pattern.permute.xlu0 1
    %1291 = vperm.xlu0 %1290, %v285
    %v1292 = vpop.permute.xlu0 %1291
    %1294 = vset.pattern.permute.xlu0 1
    %1295 = vperm.xlu0 %1294, %v286
    %v1296 = vpop.permute.xlu0 %1295
    %1298 = vset.pattern.permute.xlu0 1
    %1299 = vperm.xlu0 %1298, %v287
    %v1300 = vpop.permute.xlu0 %1299
    %1302 = vset.pattern.permute.xlu0 1
    %1303 = vperm.xlu0 %1302, %v288
    %v1304 = vpop.permute.xlu0 %1303
    %1306 = vset.pattern.permute.xlu0 1
    %1307 = vperm.xlu0 %1306, %v289
    %v1308 = vpop.permute.xlu0 %1307
    %1310 = vset.pattern.permute.xlu0 1
    %1311 = vperm.xlu0 %1310, %v290
    %v1312 = vpop.permute.xlu0 %1311
    %1314 = vset.pattern.permute.xlu0 1
    %1315 = vperm.xlu0 %1314, %v291
    %v1316 = vpop.permute.xlu0 %1315
    %1318 = vset.pattern.permute.xlu0 1
    %1319 = vperm.xlu0 %1318, %v292
    %v1320 = vpop.permute.xlu0 %1319
    %1322 = vset.pattern.permute.xlu0 1
    %1323 = vperm.xlu0 %1322, %v293
    %v1324 = vpop.permute.xlu0 %1323
    %1326 = vset.pattern.permute.xlu0 1
    %1327 = vperm.xlu0 %1326, %v294
    %v1328 = vpop.permute.xlu0 %1327
    %1330 = vset.pattern.permute.xlu0 1
    %1331 = vperm.xlu0 %1330, %v295
    %v1332 = vpop.permute.xlu0 %1331
    %1334 = vset.pattern.permute.xlu0 1
    %1335 = vperm.xlu0 %1334, %v296
    %v1336 = vpop.permute.xlu0 %1335
    %1338 = vset.pattern.permute.xlu0 1
    %1339 = vperm.xlu0 %1338, %v297
    %v1340 = vpop.permute.xlu0 %1339
    %1342 = vset.pattern.permute.xlu0 1
    %1343 = vperm.xlu0 %1342, %v298
    %v1344 = vpop.permute.xlu0 %1343
    %1346 = vset.pattern.permute.xlu0 1
    %1347 = vperm.xlu0 %1346, %v299
    %v1348 = vpop.permute.xlu0 %1347
    %1350 = vset.pattern.permute.xlu0 1
    %1351 = vperm.xlu0 %1350, %v300
    %v1352 = vpop.permute.xlu0 %1351
    %1354 = vset.pattern.permute.xlu0 1
    %1355 = vperm.xlu0 %1354, %v301
    %v1356 = vpop.permute.xlu0 %1355
    %1358 = vset.pattern.permute.xlu0 1
    %1359 = vperm.xlu0 %1358, %v302
    %v1360 = vpop.permute.xlu0 %1359
    %1362 = vset.pattern.permute.xlu0 1
    %1363 = vperm.xlu0 %1362, %v303
    %v1364 = vpop.permute.xlu0 %1363
    %1366 = vset.pattern.permute.xlu0 1
    %1367 = vperm.xlu0 %1366, %v304
    %v1368 = vpop.permute.xlu0 %1367
    %v1370 = vlaneseq
    %v1371 = vshrl.u32 %v1370, 7
    %v1372 = vsub.s32 1, %v1371
    %v1373 = vrot.slane %v305, %v1372
    %v1374 = vlaneseq
    %v1375 = vshrl.u32 %v1374, 7
    %v1376 = vsub.s32 3, %v1375
    %v1377 = vrot.slane %v305, %v1376
    %v1378 = vlaneseq
    %v1379 = vshrl.u32 %v1378, 7
    %v1380 = vsub.s32 5, %v1379
    %v1381 = vrot.slane %v305, %v1380
    %v1382 = vlaneseq
    %v1383 = vshrl.u32 %v1382, 7
    %v1384 = vsub.s32 7, %v1383
    %v1385 = vrot.slane %v305, %v1384
    %v1390 = vlaneseq
    %v1391 = vshrl.u32 %v1390, 7
    %v1392 = vsub.s32 1, %v1391
    %v1393 = vrot.slane %v1373, %v1392
    %v1394 = vlaneseq
    %v1395 = vshrl.u32 %v1394, 7
    %v1396 = vsub.s32 1, %v1395
    %v1397 = vrot.slane %v1377, %v1396
    %v1398 = vlaneseq
    %v1399 = vshrl.u32 %v1398, 7
    %v1400 = vsub.s32 1, %v1399
    %v1401 = vrot.slane %v1381, %v1400
    %v1402 = vlaneseq
    %v1403 = vshrl.u32 %v1402, 7
    %v1404 = vsub.s32 1, %v1403
    %v1405 = vrot.slane %v1385, %v1404
    %v1406 = vmul.f32 %v1244, %v1393
    %v1407 = vmul.f32 %v1244, %v1397
    %v1408 = vmul.f32 %v1244, %v1401
    %v1409 = vmul.f32 %v1244, %v1405
    %v1410 = vmul.f32 %v1248, %v1393
    %v1411 = vmul.f32 %v1248, %v1397
    %v1412 = vmul.f32 %v1248, %v1401
    %v1413 = vmul.f32 %v1248, %v1405
    %v1414 = vmul.f32 %v1252, %v1393
    %v1415 = vmul.f32 %v1252, %v1397
    %v1416 = vmul.f32 %v1252, %v1401
    %v1417 = vmul.f32 %v1252, %v1405
    %v1418 = vmul.f32 %v1256, %v1393
    %v1419 = vmul.f32 %v1256, %v1397
    %v1420 = vmul.f32 %v1256, %v1401
    %v1421 = vmul.f32 %v1256, %v1405
    %v1422 = vmul.f32 %v1260, %v1393
    %v1423 = vmul.f32 %v1260, %v1397
    %v1424 = vmul.f32 %v1260, %v1401
    %v1425 = vmul.f32 %v1260, %v1405
    %v1426 = vmul.f32 %v1264, %v1393
    %v1427 = vmul.f32 %v1264, %v1397
    %v1428 = vmul.f32 %v1264, %v1401
    %v1429 = vmul.f32 %v1264, %v1405
    %v1430 = vmul.f32 %v1268, %v1393
    %v1431 = vmul.f32 %v1268, %v1397
    %v1432 = vmul.f32 %v1268, %v1401
    %v1433 = vmul.f32 %v1268, %v1405
    %v1434 = vmul.f32 %v1272, %v1393
    %v1435 = vmul.f32 %v1272, %v1397
    %v1436 = vmul.f32 %v1272, %v1401
    %v1437 = vmul.f32 %v1272, %v1405
    %v1438 = vmul.f32 %v1276, %v1393
    %v1439 = vmul.f32 %v1276, %v1397
    %v1440 = vmul.f32 %v1276, %v1401
    %v1441 = vmul.f32 %v1276, %v1405
    %v1442 = vmul.f32 %v1280, %v1393
    %v1443 = vmul.f32 %v1280, %v1397
    %v1444 = vmul.f32 %v1280, %v1401
    %v1445 = vmul.f32 %v1280, %v1405
    %v1446 = vmul.f32 %v1284, %v1393
    %v1447 = vmul.f32 %v1284, %v1397
    %v1448 = vmul.f32 %v1284, %v1401
    %v1449 = vmul.f32 %v1284, %v1405
    %v1450 = vmul.f32 %v1288, %v1393
    %v1451 = vmul.f32 %v1288, %v1397
    %v1452 = vmul.f32 %v1288, %v1401
    %v1453 = vmul.f32 %v1288, %v1405
    %v1454 = vmul.f32 %v1292, %v1393
    %v1455 = vmul.f32 %v1292, %v1397
    %v1456 = vmul.f32 %v1292, %v1401
    %v1457 = vmul.f32 %v1292, %v1405
    %v1458 = vmul.f32 %v1296, %v1393
    %v1459 = vmul.f32 %v1296, %v1397
    %v1460 = vmul.f32 %v1296, %v1401
    %v1461 = vmul.f32 %v1296, %v1405
    %v1462 = vmul.f32 %v1300, %v1393
    %v1463 = vmul.f32 %v1300, %v1397
    %v1464 = vmul.f32 %v1300, %v1401
    %v1465 = vmul.f32 %v1300, %v1405
    %v1466 = vmul.f32 %v1304, %v1393
    %v1467 = vmul.f32 %v1304, %v1397
    %v1468 = vmul.f32 %v1304, %v1401
    %v1469 = vmul.f32 %v1304, %v1405
    %v1470 = vmul.f32 %v1308, %v1393
    %v1471 = vmul.f32 %v1308, %v1397
    %v1472 = vmul.f32 %v1308, %v1401
    %v1473 = vmul.f32 %v1308, %v1405
    %v1474 = vmul.f32 %v1312, %v1393
    %v1475 = vmul.f32 %v1312, %v1397
    %v1476 = vmul.f32 %v1312, %v1401
    %v1477 = vmul.f32 %v1312, %v1405
    %v1478 = vmul.f32 %v1316, %v1393
    %v1479 = vmul.f32 %v1316, %v1397
    %v1480 = vmul.f32 %v1316, %v1401
    %v1481 = vmul.f32 %v1316, %v1405
    %v1482 = vmul.f32 %v1320, %v1393
    %v1483 = vmul.f32 %v1320, %v1397
    %v1484 = vmul.f32 %v1320, %v1401
    %v1485 = vmul.f32 %v1320, %v1405
    %v1486 = vmul.f32 %v1324, %v1393
    %v1487 = vmul.f32 %v1324, %v1397
    %v1488 = vmul.f32 %v1324, %v1401
    %v1489 = vmul.f32 %v1324, %v1405
    %v1490 = vmul.f32 %v1328, %v1393
    %v1491 = vmul.f32 %v1328, %v1397
    %v1492 = vmul.f32 %v1328, %v1401
    %v1493 = vmul.f32 %v1328, %v1405
    %v1494 = vmul.f32 %v1332, %v1393
    %v1495 = vmul.f32 %v1332, %v1397
    %v1496 = vmul.f32 %v1332, %v1401
    %v1497 = vmul.f32 %v1332, %v1405
    %v1498 = vmul.f32 %v1336, %v1393
    %v1499 = vmul.f32 %v1336, %v1397
    %v1500 = vmul.f32 %v1336, %v1401
    %v1501 = vmul.f32 %v1336, %v1405
    %v1502 = vmul.f32 %v1340, %v1393
    %v1503 = vmul.f32 %v1340, %v1397
    %v1504 = vmul.f32 %v1340, %v1401
    %v1505 = vmul.f32 %v1340, %v1405
    %v1506 = vmul.f32 %v1344, %v1393
    %v1507 = vmul.f32 %v1344, %v1397
    %v1508 = vmul.f32 %v1344, %v1401
    %v1509 = vmul.f32 %v1344, %v1405
    %v1510 = vmul.f32 %v1348, %v1393
    %v1511 = vmul.f32 %v1348, %v1397
    %v1512 = vmul.f32 %v1348, %v1401
    %v1513 = vmul.f32 %v1348, %v1405
    %v1514 = vmul.f32 %v1352, %v1393
    %v1515 = vmul.f32 %v1352, %v1397
    %v1516 = vmul.f32 %v1352, %v1401
    %v1517 = vmul.f32 %v1352, %v1405
    %v1518 = vmul.f32 %v1356, %v1393
    %v1519 = vmul.f32 %v1356, %v1397
    %v1520 = vmul.f32 %v1356, %v1401
    %v1521 = vmul.f32 %v1356, %v1405
    %v1522 = vmul.f32 %v1360, %v1393
    %v1523 = vmul.f32 %v1360, %v1397
    %v1524 = vmul.f32 %v1360, %v1401
    %v1525 = vmul.f32 %v1360, %v1405
    %v1526 = vmul.f32 %v1364, %v1393
    %v1527 = vmul.f32 %v1364, %v1397
    %v1528 = vmul.f32 %v1364, %v1401
    %v1529 = vmul.f32 %v1364, %v1405
    %v1530 = vmul.f32 %v1368, %v1393
    %v1531 = vmul.f32 %v1368, %v1397
    %v1532 = vmul.f32 %v1368, %v1401
    %v1533 = vmul.f32 %v1368, %v1405
    %v1534 = vadd.f32 %v795, %v1406
    %v1535 = vadd.f32 %v797, %v1407
    %v1536 = vadd.f32 %v1052, %v1408
    %v1537 = vadd.f32 %v1054, %v1409
    %v1538 = vadd.f32 %v801, %v1410
    %v1539 = vadd.f32 %v803, %v1411
    %v1540 = vadd.f32 %v1058, %v1412
    %v1541 = vadd.f32 %v1060, %v1413
    %v1542 = vadd.f32 %v807, %v1414
    %v1543 = vadd.f32 %v809, %v1415
    %v1544 = vadd.f32 %v1064, %v1416
    %v1545 = vadd.f32 %v1066, %v1417
    %v1546 = vadd.f32 %v813, %v1418
    %v1547 = vadd.f32 %v815, %v1419
    %v1548 = vadd.f32 %v1070, %v1420
    %v1549 = vadd.f32 %v1072, %v1421
    %v1550 = vadd.f32 %v819, %v1422
    %v1551 = vadd.f32 %v821, %v1423
    %v1552 = vadd.f32 %v1076, %v1424
    %v1553 = vadd.f32 %v1078, %v1425
    %v1554 = vadd.f32 %v825, %v1426
    %v1555 = vadd.f32 %v827, %v1427
    %v1556 = vadd.f32 %v1082, %v1428
    %v1557 = vadd.f32 %v1084, %v1429
    %v1558 = vadd.f32 %v831, %v1430
    %v1559 = vadd.f32 %v833, %v1431
    %v1560 = vadd.f32 %v1088, %v1432
    %v1561 = vadd.f32 %v1090, %v1433
    %v1562 = vadd.f32 %v837, %v1434
    %v1563 = vadd.f32 %v839, %v1435
    %v1564 = vadd.f32 %v1094, %v1436
    %v1565 = vadd.f32 %v1096, %v1437
    %v1566 = vadd.f32 %v843, %v1438
    %v1567 = vadd.f32 %v845, %v1439
    %v1568 = vadd.f32 %v1100, %v1440
    %v1569 = vadd.f32 %v1102, %v1441
    %v1570 = vadd.f32 %v849, %v1442
    %v1571 = vadd.f32 %v851, %v1443
    %v1572 = vadd.f32 %v1106, %v1444
    %v1573 = vadd.f32 %v1108, %v1445
    %v1574 = vadd.f32 %v855, %v1446
    %v1575 = vadd.f32 %v857, %v1447
    %v1576 = vadd.f32 %v1112, %v1448
    %v1577 = vadd.f32 %v1114, %v1449
    %v1578 = vadd.f32 %v861, %v1450
    %v1579 = vadd.f32 %v863, %v1451
    %v1580 = vadd.f32 %v1118, %v1452
    %v1581 = vadd.f32 %v1120, %v1453
    %v1582 = vadd.f32 %v867, %v1454
    %v1583 = vadd.f32 %v869, %v1455
    %v1584 = vadd.f32 %v1124, %v1456
    %v1585 = vadd.f32 %v1126, %v1457
    %v1586 = vadd.f32 %v873, %v1458
    %v1587 = vadd.f32 %v875, %v1459
    %v1588 = vadd.f32 %v1130, %v1460
    %v1589 = vadd.f32 %v1132, %v1461
    %v1590 = vadd.f32 %v879, %v1462
    %v1591 = vadd.f32 %v881, %v1463
    %v1592 = vadd.f32 %v1136, %v1464
    %v1593 = vadd.f32 %v1138, %v1465
    %v1594 = vadd.f32 %v885, %v1466
    %v1595 = vadd.f32 %v887, %v1467
    %v1596 = vadd.f32 %v1142, %v1468
    %v1597 = vadd.f32 %v1144, %v1469
    %v1598 = vadd.f32 %v891, %v1470
    %v1599 = vadd.f32 %v893, %v1471
    %v1600 = vadd.f32 %v1148, %v1472
    %v1601 = vadd.f32 %v1150, %v1473
    %v1602 = vadd.f32 %v897, %v1474
    %v1603 = vadd.f32 %v899, %v1475
    %v1604 = vadd.f32 %v1154, %v1476
    %v1605 = vadd.f32 %v1156, %v1477
    %v1606 = vadd.f32 %v903, %v1478
    %v1607 = vadd.f32 %v905, %v1479
    %v1608 = vadd.f32 %v1160, %v1480
    %v1609 = vadd.f32 %v1162, %v1481
    %v1610 = vadd.f32 %v909, %v1482
    %v1611 = vadd.f32 %v911, %v1483
    %v1612 = vadd.f32 %v1166, %v1484
    %v1613 = vadd.f32 %v1168, %v1485
    %v1614 = vadd.f32 %v915, %v1486
    %v1615 = vadd.f32 %v917, %v1487
    %v1616 = vadd.f32 %v1172, %v1488
    %v1617 = vadd.f32 %v1174, %v1489
    %v1618 = vadd.f32 %v921, %v1490
    %v1619 = vadd.f32 %v923, %v1491
    %v1620 = vadd.f32 %v1178, %v1492
    %v1621 = vadd.f32 %v1180, %v1493
    %v1622 = vadd.f32 %v927, %v1494
    %v1623 = vadd.f32 %v929, %v1495
    %v1624 = vadd.f32 %v1184, %v1496
    %v1625 = vadd.f32 %v1186, %v1497
    %v1626 = vadd.f32 %v933, %v1498
    %v1627 = vadd.f32 %v935, %v1499
    %v1628 = vadd.f32 %v1190, %v1500
    %v1629 = vadd.f32 %v1192, %v1501
    %v1630 = vadd.f32 %v939, %v1502
    %v1631 = vadd.f32 %v941, %v1503
    %v1632 = vadd.f32 %v1196, %v1504
    %v1633 = vadd.f32 %v1198, %v1505
    %v1634 = vadd.f32 %v945, %v1506
    %v1635 = vadd.f32 %v947, %v1507
    %v1636 = vadd.f32 %v1202, %v1508
    %v1637 = vadd.f32 %v1204, %v1509
    %v1638 = vadd.f32 %v951, %v1510
    %v1639 = vadd.f32 %v953, %v1511
    %v1640 = vadd.f32 %v1208, %v1512
    %v1641 = vadd.f32 %v1210, %v1513
    %v1642 = vadd.f32 %v957, %v1514
    %v1643 = vadd.f32 %v959, %v1515
    %v1644 = vadd.f32 %v1214, %v1516
    %v1645 = vadd.f32 %v1216, %v1517
    %v1646 = vadd.f32 %v963, %v1518
    %v1647 = vadd.f32 %v965, %v1519
    %v1648 = vadd.f32 %v1220, %v1520
    %v1649 = vadd.f32 %v1222, %v1521
    %v1650 = vadd.f32 %v969, %v1522
    %v1651 = vadd.f32 %v971, %v1523
    %v1652 = vadd.f32 %v1226, %v1524
    %v1653 = vadd.f32 %v1228, %v1525
    %v1654 = vadd.f32 %v975, %v1526
    %v1655 = vadd.f32 %v977, %v1527
    %v1656 = vadd.f32 %v1232, %v1528
    %v1657 = vadd.f32 %v1234, %v1529
    %v1658 = vadd.f32 %v981, %v1530
    %v1659 = vadd.f32 %v983, %v1531
    %v1660 = vadd.f32 %v1238, %v1532
    %v1661 = vadd.f32 %v1240, %v1533
    %v1662 = vmul.f32 %v1534, 0.2
    %v1663 = vmul.f32 %v1535, 0.2
    %v1664 = vmul.f32 %v1536, 0.2
    %v1665 = vmul.f32 %v1537, 0.2
    %v1666 = vmul.f32 %v1538, 0.2
    %v1667 = vmul.f32 %v1539, 0.2
    %v1668 = vmul.f32 %v1540, 0.2
    %v1669 = vmul.f32 %v1541, 0.2
    %v1670 = vmul.f32 %v1542, 0.2
    %v1671 = vmul.f32 %v1543, 0.2
    %v1672 = vmul.f32 %v1544, 0.2
    %v1673 = vmul.f32 %v1545, 0.2
    %v1674 = vmul.f32 %v1546, 0.2
    %v1675 = vmul.f32 %v1547, 0.2
    %v1676 = vmul.f32 %v1548, 0.2
    %v1677 = vmul.f32 %v1549, 0.2
    %v1678 = vmul.f32 %v1550, 0.2
    %v1679 = vmul.f32 %v1551, 0.2
    %v1680 = vmul.f32 %v1552, 0.2
    %v1681 = vmul.f32 %v1553, 0.2
    %v1682 = vmul.f32 %v1554, 0.2
    %v1683 = vmul.f32 %v1555, 0.2
    %v1684 = vmul.f32 %v1556, 0.2
    %v1685 = vmul.f32 %v1557, 0.2
    %v1686 = vmul.f32 %v1558, 0.2
    %v1687 = vmul.f32 %v1559, 0.2
    %v1688 = vmul.f32 %v1560, 0.2
    %v1689 = vmul.f32 %v1561, 0.2
    %v1690 = vmul.f32 %v1562, 0.2
    %v1691 = vmul.f32 %v1563, 0.2
    %v1692 = vmul.f32 %v1564, 0.2
    %v1693 = vmul.f32 %v1565, 0.2
    %v1694 = vmul.f32 %v1566, 0.2
    %v1695 = vmul.f32 %v1567, 0.2
    %v1696 = vmul.f32 %v1568, 0.2
    %v1697 = vmul.f32 %v1569, 0.2
    %v1698 = vmul.f32 %v1570, 0.2
    %v1699 = vmul.f32 %v1571, 0.2
    %v1700 = vmul.f32 %v1572, 0.2
    %v1701 = vmul.f32 %v1573, 0.2
    %v1702 = vmul.f32 %v1574, 0.2
    %v1703 = vmul.f32 %v1575, 0.2
    %v1704 = vmul.f32 %v1576, 0.2
    %v1705 = vmul.f32 %v1577, 0.2
    %v1706 = vmul.f32 %v1578, 0.2
    %v1707 = vmul.f32 %v1579, 0.2
    %v1708 = vmul.f32 %v1580, 0.2
    %v1709 = vmul.f32 %v1581, 0.2
    %v1710 = vmul.f32 %v1582, 0.2
    %v1711 = vmul.f32 %v1583, 0.2
    %v1712 = vmul.f32 %v1584, 0.2
    %v1713 = vmul.f32 %v1585, 0.2
    %v1714 = vmul.f32 %v1586, 0.2
    %v1715 = vmul.f32 %v1587, 0.2
    %v1716 = vmul.f32 %v1588, 0.2
    %v1717 = vmul.f32 %v1589, 0.2
    %v1718 = vmul.f32 %v1590, 0.2
    %v1719 = vmul.f32 %v1591, 0.2
    %v1720 = vmul.f32 %v1592, 0.2
    %v1721 = vmul.f32 %v1593, 0.2
    %v1722 = vmul.f32 %v1594, 0.2
    %v1723 = vmul.f32 %v1595, 0.2
    %v1724 = vmul.f32 %v1596, 0.2
    %v1725 = vmul.f32 %v1597, 0.2
    %v1726 = vmul.f32 %v1598, 0.2
    %v1727 = vmul.f32 %v1599, 0.2
    %v1728 = vmul.f32 %v1600, 0.2
    %v1729 = vmul.f32 %v1601, 0.2
    %v1730 = vmul.f32 %v1602, 0.2
    %v1731 = vmul.f32 %v1603, 0.2
    %v1732 = vmul.f32 %v1604, 0.2
    %v1733 = vmul.f32 %v1605, 0.2
    %v1734 = vmul.f32 %v1606, 0.2
    %v1735 = vmul.f32 %v1607, 0.2
    %v1736 = vmul.f32 %v1608, 0.2
    %v1737 = vmul.f32 %v1609, 0.2
    %v1738 = vmul.f32 %v1610, 0.2
    %v1739 = vmul.f32 %v1611, 0.2
    %v1740 = vmul.f32 %v1612, 0.2
    %v1741 = vmul.f32 %v1613, 0.2
    %v1742 = vmul.f32 %v1614, 0.2
    %v1743 = vmul.f32 %v1615, 0.2
    %v1744 = vmul.f32 %v1616, 0.2
    %v1745 = vmul.f32 %v1617, 0.2
    %v1746 = vmul.f32 %v1618, 0.2
    %v1747 = vmul.f32 %v1619, 0.2
    %v1748 = vmul.f32 %v1620, 0.2
    %v1749 = vmul.f32 %v1621, 0.2
    %v1750 = vmul.f32 %v1622, 0.2
    %v1751 = vmul.f32 %v1623, 0.2
    %v1752 = vmul.f32 %v1624, 0.2
    %v1753 = vmul.f32 %v1625, 0.2
    %v1754 = vmul.f32 %v1626, 0.2
    %v1755 = vmul.f32 %v1627, 0.2
    %v1756 = vmul.f32 %v1628, 0.2
    %v1757 = vmul.f32 %v1629, 0.2
    %v1758 = vmul.f32 %v1630, 0.2
    %v1759 = vmul.f32 %v1631, 0.2
    %v1760 = vmul.f32 %v1632, 0.2
    %v1761 = vmul.f32 %v1633, 0.2
    %v1762 = vmul.f32 %v1634, 0.2
    %v1763 = vmul.f32 %v1635, 0.2
    %v1764 = vmul.f32 %v1636, 0.2
    %v1765 = vmul.f32 %v1637, 0.2
    %v1766 = vmul.f32 %v1638, 0.2
    %v1767 = vmul.f32 %v1639, 0.2
    %v1768 = vmul.f32 %v1640, 0.2
    %v1769 = vmul.f32 %v1641, 0.2
    %v1770 = vmul.f32 %v1642, 0.2
    %v1771 = vmul.f32 %v1643, 0.2
    %v1772 = vmul.f32 %v1644, 0.2
    %v1773 = vmul.f32 %v1645, 0.2
    %v1774 = vmul.f32 %v1646, 0.2
    %v1775 = vmul.f32 %v1647, 0.2
    %v1776 = vmul.f32 %v1648, 0.2
    %v1777 = vmul.f32 %v1649, 0.2
    %v1778 = vmul.f32 %v1650, 0.2
    %v1779 = vmul.f32 %v1651, 0.2
    %v1780 = vmul.f32 %v1652, 0.2
    %v1781 = vmul.f32 %v1653, 0.2
    %v1782 = vmul.f32 %v1654, 0.2
    %v1783 = vmul.f32 %v1655, 0.2
    %v1784 = vmul.f32 %v1656, 0.2
    %v1785 = vmul.f32 %v1657, 0.2
    %v1786 = vmul.f32 %v1658, 0.2
    %v1787 = vmul.f32 %v1659, 0.2
    %v1788 = vmul.f32 %v1660, 0.2
    %v1789 = vmul.f32 %v1661, 0.2
    %v1790 = vmax.f32 %v1534, %v1662
    %v1791 = vmax.f32 %v1535, %v1663
    %v1792 = vmax.f32 %v1536, %v1664
    %v1793 = vmax.f32 %v1537, %v1665
    %v1794 = vmax.f32 %v1538, %v1666
    %v1795 = vmax.f32 %v1539, %v1667
    %v1796 = vmax.f32 %v1540, %v1668
    %v1797 = vmax.f32 %v1541, %v1669
    %v1798 = vmax.f32 %v1542, %v1670
    %v1799 = vmax.f32 %v1543, %v1671
    %v1800 = vmax.f32 %v1544, %v1672
    %v1801 = vmax.f32 %v1545, %v1673
    %v1802 = vmax.f32 %v1546, %v1674
    %v1803 = vmax.f32 %v1547, %v1675
    %v1804 = vmax.f32 %v1548, %v1676
    %v1805 = vmax.f32 %v1549, %v1677
    %v1806 = vmax.f32 %v1550, %v1678
    %v1807 = vmax.f32 %v1551, %v1679
    %v1808 = vmax.f32 %v1552, %v1680
    %v1809 = vmax.f32 %v1553, %v1681
    %v1810 = vmax.f32 %v1554, %v1682
    %v1811 = vmax.f32 %v1555, %v1683
    %v1812 = vmax.f32 %v1556, %v1684
    %v1813 = vmax.f32 %v1557, %v1685
    %v1814 = vmax.f32 %v1558, %v1686
    %v1815 = vmax.f32 %v1559, %v1687
    %v1816 = vmax.f32 %v1560, %v1688
    %v1817 = vmax.f32 %v1561, %v1689
    %v1818 = vmax.f32 %v1562, %v1690
    %v1819 = vmax.f32 %v1563, %v1691
    %v1820 = vmax.f32 %v1564, %v1692
    %v1821 = vmax.f32 %v1565, %v1693
    %v1822 = vmax.f32 %v1566, %v1694
    %v1823 = vmax.f32 %v1567, %v1695
    %v1824 = vmax.f32 %v1568, %v1696
    %v1825 = vmax.f32 %v1569, %v1697
    %v1826 = vmax.f32 %v1570, %v1698
    %v1827 = vmax.f32 %v1571, %v1699
    %v1828 = vmax.f32 %v1572, %v1700
    %v1829 = vmax.f32 %v1573, %v1701
    %v1830 = vmax.f32 %v1574, %v1702
    %v1831 = vmax.f32 %v1575, %v1703
    %v1832 = vmax.f32 %v1576, %v1704
    %v1833 = vmax.f32 %v1577, %v1705
    %v1834 = vmax.f32 %v1578, %v1706
    %v1835 = vmax.f32 %v1579, %v1707
    %v1836 = vmax.f32 %v1580, %v1708
    %v1837 = vmax.f32 %v1581, %v1709
    %v1838 = vmax.f32 %v1582, %v1710
    %v1839 = vmax.f32 %v1583, %v1711
    %v1840 = vmax.f32 %v1584, %v1712
    %v1841 = vmax.f32 %v1585, %v1713
    %v1842 = vmax.f32 %v1586, %v1714
    %v1843 = vmax.f32 %v1587, %v1715
    %v1844 = vmax.f32 %v1588, %v1716
    %v1845 = vmax.f32 %v1589, %v1717
    %v1846 = vmax.f32 %v1590, %v1718
    %v1847 = vmax.f32 %v1591, %v1719
    %v1848 = vmax.f32 %v1592, %v1720
    %v1849 = vmax.f32 %v1593, %v1721
    %v1850 = vmax.f32 %v1594, %v1722
    %v1851 = vmax.f32 %v1595, %v1723
    %v1852 = vmax.f32 %v1596, %v1724
    %v1853 = vmax.f32 %v1597, %v1725
    %v1854 = vmax.f32 %v1598, %v1726
    %v1855 = vmax.f32 %v1599, %v1727
    %v1856 = vmax.f32 %v1600, %v1728
    %v1857 = vmax.f32 %v1601, %v1729
    %v1858 = vmax.f32 %v1602, %v1730
    %v1859 = vmax.f32 %v1603, %v1731
    %v1860 = vmax.f32 %v1604, %v1732
    %v1861 = vmax.f32 %v1605, %v1733
    %v1862 = vmax.f32 %v1606, %v1734
    %v1863 = vmax.f32 %v1607, %v1735
    %v1864 = vmax.f32 %v1608, %v1736
    %v1865 = vmax.f32 %v1609, %v1737
    %v1866 = vmax.f32 %v1610, %v1738
    %v1867 = vmax.f32 %v1611, %v1739
    %v1868 = vmax.f32 %v1612, %v1740
    %v1869 = vmax.f32 %v1613, %v1741
    %v1870 = vmax.f32 %v1614, %v1742
    %v1871 = vmax.f32 %v1615, %v1743
    %v1872 = vmax.f32 %v1616, %v1744
    %v1873 = vmax.f32 %v1617, %v1745
    %v1874 = vmax.f32 %v1618, %v1746
    %v1875 = vmax.f32 %v1619, %v1747
    %v1876 = vmax.f32 %v1620, %v1748
    %v1877 = vmax.f32 %v1621, %v1749
    %v1878 = vmax.f32 %v1622, %v1750
    %v1879 = vmax.f32 %v1623, %v1751
    %v1880 = vmax.f32 %v1624, %v1752
    %v1881 = vmax.f32 %v1625, %v1753
    %v1882 = vmax.f32 %v1626, %v1754
    %v1883 = vmax.f32 %v1627, %v1755
    %v1884 = vmax.f32 %v1628, %v1756
    %v1885 = vmax.f32 %v1629, %v1757
    %v1886 = vmax.f32 %v1630, %v1758
    %v1887 = vmax.f32 %v1631, %v1759
    %v1888 = vmax.f32 %v1632, %v1760
    %v1889 = vmax.f32 %v1633, %v1761
    %v1890 = vmax.f32 %v1634, %v1762
    %v1891 = vmax.f32 %v1635, %v1763
    %v1892 = vmax.f32 %v1636, %v1764
    %v1893 = vmax.f32 %v1637, %v1765
    %v1894 = vmax.f32 %v1638, %v1766
    %v1895 = vmax.f32 %v1639, %v1767
    %v1896 = vmax.f32 %v1640, %v1768
    %v1897 = vmax.f32 %v1641, %v1769
    %v1898 = vmax.f32 %v1642, %v1770
    %v1899 = vmax.f32 %v1643, %v1771
    %v1900 = vmax.f32 %v1644, %v1772
    %v1901 = vmax.f32 %v1645, %v1773
    %v1902 = vmax.f32 %v1646, %v1774
    %v1903 = vmax.f32 %v1647, %v1775
    %v1904 = vmax.f32 %v1648, %v1776
    %v1905 = vmax.f32 %v1649, %v1777
    %v1906 = vmax.f32 %v1650, %v1778
    %v1907 = vmax.f32 %v1651, %v1779
    %v1908 = vmax.f32 %v1652, %v1780
    %v1909 = vmax.f32 %v1653, %v1781
    %v1910 = vmax.f32 %v1654, %v1782
    %v1911 = vmax.f32 %v1655, %v1783
    %v1912 = vmax.f32 %v1656, %v1784
    %v1913 = vmax.f32 %v1657, %v1785
    %v1914 = vmax.f32 %v1658, %v1786
    %v1915 = vmax.f32 %v1659, %v1787
    %v1916 = vmax.f32 %v1660, %v1788
    %v1917 = vmax.f32 %v1661, %v1789
    %v1918 = vld [vmem:[#allocation2] sm:$0xff]
    %v1919 = vld [vmem:[#allocation2 + $0x8] sm:$0xff]
    %v1920 = vld [vmem:[#allocation2 + $0x10] sm:$0xff]
    %v1921 = vld [vmem:[#allocation2 + $0x18] sm:$0xff]
    %v1922 = vld [vmem:[#allocation2 + $0x20] sm:$0xff]
    %v1923 = vld [vmem:[#allocation2 + $0x28] sm:$0xff]
    %v1924 = vld [vmem:[#allocation2 + $0x30] sm:$0xff]
    %v1925 = vld [vmem:[#allocation2 + $0x38] sm:$0xff]
    %v1926 = vld [vmem:[#allocation2 + $0x40] sm:$0xff]
    %v1927 = vld [vmem:[#allocation2 + $0x48] sm:$0xff]
    %v1928 = vld [vmem:[#allocation2 + $0x50] sm:$0xff]
    %v1929 = vld [vmem:[#allocation2 + $0x58] sm:$0xff]
    %v1930 = vld [vmem:[#allocation2 + $0x60] sm:$0xff]
    %v1931 = vld [vmem:[#allocation2 + $0x68] sm:$0xff]
    %v1932 = vld [vmem:[#allocation2 + $0x70] sm:$0xff]
    %v1933 = vld [vmem:[#allocation2 + $0x78] sm:$0xff]
    %v1934 = vld [vmem:[#allocation2 + $0x80] sm:$0xff]
    %v1935 = vld [vmem:[#allocation2 + $0x88] sm:$0xff]
    %v1936 = vld [vmem:[#allocation2 + $0x90] sm:$0xff]
    %v1937 = vld [vmem:[#allocation2 + $0x98] sm:$0xff]
    %v1938 = vld [vmem:[#allocation2 + $0xa0] sm:$0xff]
    %v1939 = vld [vmem:[#allocation2 + $0xa8] sm:$0xff]
    %v1940 = vld [vmem:[#allocation2 + $0xb0] sm:$0xff]
    %v1941 = vld [vmem:[#allocation2 + $0xb8] sm:$0xff]
    %v1942 = vld [vmem:[#allocation2 + $0xc0] sm:$0xff]
    %v1943 = vld [vmem:[#allocation2 + $0xc8] sm:$0xff]
    %v1944 = vld [vmem:[#allocation2 + $0xd0] sm:$0xff]
    %v1945 = vld [vmem:[#allocation2 + $0xd8] sm:$0xff]
    %v1946 = vld [vmem:[#allocation2 + $0xe0] sm:$0xff]
    %v1947 = vld [vmem:[#allocation2 + $0xe8] sm:$0xff]
    %v1948 = vld [vmem:[#allocation2 + $0xf0] sm:$0xff]
    %v1949 = vld [vmem:[#allocation2 + $0xf8] sm:$0xff]
    %v1950 = vld [vmem:[#allocation2 + $0x100] sm:$0xff]
    %v1951 = vld [vmem:[#allocation2 + $0x108] sm:$0xff]
    %v1952 = vld [vmem:[#allocation2 + $0x110] sm:$0xff]
    %v1953 = vld [vmem:[#allocation2 + $0x118] sm:$0xff]
    %v1954 = vld [vmem:[#allocation2 + $0x120] sm:$0xff]
    %v1955 = vld [vmem:[#allocation2 + $0x128] sm:$0xff]
    %v1956 = vld [vmem:[#allocation2 + $0x130] sm:$0xff]
    %v1957 = vld [vmem:[#allocation2 + $0x138] sm:$0xff]
    %v1958 = vld [vmem:[#allocation2 + $0x140] sm:$0xff]
    %v1959 = vld [vmem:[#allocation2 + $0x148] sm:$0xff]
    %v1960 = vld [vmem:[#allocation2 + $0x150] sm:$0xff]
    %v1961 = vld [vmem:[#allocation2 + $0x158] sm:$0xff]
    %v1962 = vld [vmem:[#allocation2 + $0x160] sm:$0xff]
    %v1963 = vld [vmem:[#allocation2 + $0x168] sm:$0xff]
    %v1964 = vld [vmem:[#allocation2 + $0x170] sm:$0xff]
    %v1965 = vld [vmem:[#allocation2 + $0x178] sm:$0xff]
    %v1966 = vld [vmem:[#allocation2 + $0x180] sm:$0xff]
    %v1967 = vld [vmem:[#allocation2 + $0x188] sm:$0xff]
    %v1968 = vld [vmem:[#allocation2 + $0x190] sm:$0xff]
    %v1969 = vld [vmem:[#allocation2 + $0x198] sm:$0xff]
    %v1970 = vld [vmem:[#allocation2 + $0x1a0] sm:$0xff]
    %v1971 = vld [vmem:[#allocation2 + $0x1a8] sm:$0xff]
    %v1972 = vld [vmem:[#allocation2 + $0x1b0] sm:$0xff]
    %v1973 = vld [vmem:[#allocation2 + $0x1b8] sm:$0xff]
    %v1974 = vld [vmem:[#allocation2 + $0x1c0] sm:$0xff]
    %v1975 = vld [vmem:[#allocation2 + $0x1c8] sm:$0xff]
    %v1976 = vld [vmem:[#allocation2 + $0x1d0] sm:$0xff]
    %v1977 = vld [vmem:[#allocation2 + $0x1d8] sm:$0xff]
    %v1978 = vld [vmem:[#allocation2 + $0x1e0] sm:$0xff]
    %v1979 = vld [vmem:[#allocation2 + $0x1e8] sm:$0xff]
    %v1980 = vld [vmem:[#allocation2 + $0x1f0] sm:$0xff]
    %v1981 = vld [vmem:[#allocation2 + $0x1f8] sm:$0xff]
    %v1982 = vld [vmem:[#allocation2 + $0x200] sm:$0xff]
    %v1983 = vld [vmem:[#allocation2 + $0x208] sm:$0xff]
    %v1984 = vld [vmem:[#allocation2 + $0x210] sm:$0xff]
    %v1985 = vld [vmem:[#allocation2 + $0x218] sm:$0xff]
    %v1986 = vld [vmem:[#allocation2 + $0x220] sm:$0xff]
    %v1987 = vld [vmem:[#allocation2 + $0x228] sm:$0xff]
    %v1988 = vld [vmem:[#allocation2 + $0x230] sm:$0xff]
    %v1989 = vld [vmem:[#allocation2 + $0x238] sm:$0xff]
    %v1990 = vld [vmem:[#allocation2 + $0x240] sm:$0xff]
    %v1991 = vld [vmem:[#allocation2 + $0x248] sm:$0xff]
    %v1992 = vld [vmem:[#allocation2 + $0x250] sm:$0xff]
    %v1993 = vld [vmem:[#allocation2 + $0x258] sm:$0xff]
    %v1994 = vld [vmem:[#allocation2 + $0x260] sm:$0xff]
    %v1995 = vld [vmem:[#allocation2 + $0x268] sm:$0xff]
    %v1996 = vld [vmem:[#allocation2 + $0x270] sm:$0xff]
    %v1997 = vld [vmem:[#allocation2 + $0x278] sm:$0xff]
    %v1998 = vld [vmem:[#allocation2 + $0x280] sm:$0xff]
    %v1999 = vld [vmem:[#allocation2 + $0x288] sm:$0xff]
    %v2000 = vld [vmem:[#allocation2 + $0x290] sm:$0xff]
    %v2001 = vld [vmem:[#allocation2 + $0x298] sm:$0xff]
    %v2002 = vld [vmem:[#allocation2 + $0x2a0] sm:$0xff]
    %v2003 = vld [vmem:[#allocation2 + $0x2a8] sm:$0xff]
    %v2004 = vld [vmem:[#allocation2 + $0x2b0] sm:$0xff]
    %v2005 = vld [vmem:[#allocation2 + $0x2b8] sm:$0xff]
    %v2006 = vld [vmem:[#allocation2 + $0x2c0] sm:$0xff]
    %v2007 = vld [vmem:[#allocation2 + $0x2c8] sm:$0xff]
    %v2008 = vld [vmem:[#allocation2 + $0x2d0] sm:$0xff]
    %v2009 = vld [vmem:[#allocation2 + $0x2d8] sm:$0xff]
    %v2010 = vld [vmem:[#allocation2 + $0x2e0] sm:$0xff]
    %v2011 = vld [vmem:[#allocation2 + $0x2e8] sm:$0xff]
    %v2012 = vld [vmem:[#allocation2 + $0x2f0] sm:$0xff]
    %v2013 = vld [vmem:[#allocation2 + $0x2f8] sm:$0xff]
    %v2014 = vld [vmem:[#allocation2 + $0x300] sm:$0xff]
    %v2015 = vld [vmem:[#allocation2 + $0x308] sm:$0xff]
    %v2016 = vld [vmem:[#allocation2 + $0x310] sm:$0xff]
    %v2017 = vld [vmem:[#allocation2 + $0x318] sm:$0xff]
    %v2018 = vld [vmem:[#allocation2 + $0x320] sm:$0xff]
    %v2019 = vld [vmem:[#allocation2 + $0x328] sm:$0xff]
    %v2020 = vld [vmem:[#allocation2 + $0x330] sm:$0xff]
    %v2021 = vld [vmem:[#allocation2 + $0x338] sm:$0xff]
    %v2022 = vld [vmem:[#allocation2 + $0x340] sm:$0xff]
    %v2023 = vld [vmem:[#allocation2 + $0x348] sm:$0xff]
    %v2024 = vld [vmem:[#allocation2 + $0x350] sm:$0xff]
    %v2025 = vld [vmem:[#allocation2 + $0x358] sm:$0xff]
    %v2026 = vld [vmem:[#allocation2 + $0x360] sm:$0xff]
    %v2027 = vld [vmem:[#allocation2 + $0x368] sm:$0xff]
    %v2028 = vld [vmem:[#allocation2 + $0x370] sm:$0xff]
    %v2029 = vld [vmem:[#allocation2 + $0x378] sm:$0xff]
    %v2030 = vld [vmem:[#allocation2 + $0x380] sm:$0xff]
    %v2031 = vld [vmem:[#allocation2 + $0x388] sm:$0xff]
    %v2032 = vld [vmem:[#allocation2 + $0x390] sm:$0xff]
    %v2033 = vld [vmem:[#allocation2 + $0x398] sm:$0xff]
    %v2034 = vld [vmem:[#allocation2 + $0x3a0] sm:$0xff]
    %v2035 = vld [vmem:[#allocation2 + $0x3a8] sm:$0xff]
    %v2036 = vld [vmem:[#allocation2 + $0x3b0] sm:$0xff]
    %v2037 = vld [vmem:[#allocation2 + $0x3b8] sm:$0xff]
    %v2038 = vld [vmem:[#allocation2 + $0x3c0] sm:$0xff]
    %v2039 = vld [vmem:[#allocation2 + $0x3c8] sm:$0xff]
    %v2040 = vld [vmem:[#allocation2 + $0x3d0] sm:$0xff]
    %v2041 = vld [vmem:[#allocation2 + $0x3d8] sm:$0xff]
    %v2042 = vld [vmem:[#allocation2 + $0x3e0] sm:$0xff]
    %v2043 = vld [vmem:[#allocation2 + $0x3e8] sm:$0xff]
    %v2044 = vld [vmem:[#allocation2 + $0x3f0] sm:$0xff]
    %v2045 = vld [vmem:[#allocation2 + $0x3f8] sm:$0xff]
    %v2046 = vld [vmem:[%s5] sm:$0x3]
    %v2048 = vlaneseq
    %v2049 = vshrl.u32 %v2048, 7
    %v2050 = vsub.s32 0, %v2049
    %v2051 = vrot.slane %v2046, %v2050
    %v2052 = vlaneseq
    %v2053 = vshrl.u32 %v2052, 7
    %v2054 = vsub.s32 1, %v2053
    %v2055 = vrot.slane %v2046, %v2054
    %2058 = vmatprep.subr.mxu0 %v1949
    %2059 = vmatpush1.msra.mxu0 %v1948
    %2060 = vmatprep.subr.mxu0 %v1947
    %2061 = vmatpush1.msra.mxu0 %v1946
    %2062 = vmatprep.subr.mxu0 %v1945
    %2063 = vmatpush1.msra.mxu0 %v1944
    %2064 = vmatprep.subr.mxu0 %v1943
    %2065 = vmatpush1.msra.mxu0 %v1942
    %2066 = vmatprep.subr.mxu0 %v1941
    %2067 = vmatpush1.msra.mxu0 %v1940
    %2068 = vmatprep.subr.mxu0 %v1939
    %2069 = vmatpush1.msra.mxu0 %v1938
    %2070 = vmatprep.subr.mxu0 %v1937
    %2071 = vmatpush1.msra.mxu0 %v1936
    %2072 = vmatprep.subr.mxu0 %v1935
    %2073 = vmatpush1.msra.mxu0 %v1934
    %2074 = vmatprep.subr.mxu0 %v1933
    %2075 = vmatpush1.msra.mxu0 %v1932
    %2076 = vmatprep.subr.mxu0 %v1931
    %2077 = vmatpush1.msra.mxu0 %v1930
    %2078 = vmatprep.subr.mxu0 %v1929
    %2079 = vmatpush1.msra.mxu0 %v1928
    %2080 = vmatprep.subr.mxu0 %v1927
    %2081 = vmatpush1.msra.mxu0 %v1926
    %2082 = vmatprep.subr.mxu0 %v1925
    %2083 = vmatpush1.msra.mxu0 %v1924
    %2084 = vmatprep.subr.mxu0 %v1923
    %2085 = vmatpush1.msra.mxu0 %v1922
    %2086 = vmatprep.subr.mxu0 %v1921
    %2087 = vmatpush1.msra.mxu0 %v1920
    %2088 = vmatprep.subr.mxu0 %v1919
    %2089 = vmatpush1.msra.mxu0 %v1918
    %2090 = vmatprep.subr.mxu0 %v1981
    %2091 = vmatpush2.msra.mxu0 %v1980
    %2092 = vmatprep.subr.mxu0 %v1979
    %2093 = vmatpush2.msra.mxu0 %v1978
    %2094 = vmatprep.subr.mxu0 %v1977
    %2095 = vmatpush2.msra.mxu0 %v1976
    %2096 = vmatprep.subr.mxu0 %v1975
    %2097 = vmatpush2.msra.mxu0 %v1974
    %2098 = vmatprep.subr.mxu0 %v1973
    %2099 = vmatpush2.msra.mxu0 %v1972
    %2100 = vmatprep.subr.mxu0 %v1971
    %2101 = vmatpush2.msra.mxu0 %v1970
    %2102 = vmatprep.subr.mxu0 %v1969
    %2103 = vmatpush2.msra.mxu0 %v1968
    %2104 = vmatprep.subr.mxu0 %v1967
    %2105 = vmatpush2.msra.mxu0 %v1966
    %2106 = vmatprep.subr.mxu0 %v1965
    %2107 = vmatpush2.msra.mxu0 %v1964
    %2108 = vmatprep.subr.mxu0 %v1963
    %2109 = vmatpush2.msra.mxu0 %v1962
    %2110 = vmatprep.subr.mxu0 %v1961
    %2111 = vmatpush2.msra.mxu0 %v1960
    %2112 = vmatprep.subr.mxu0 %v1959
    %2113 = vmatpush2.msra.mxu0 %v1958
    %2114 = vmatprep.subr.mxu0 %v1957
    %2115 = vmatpush2.msra.mxu0 %v1956
    %2116 = vmatprep.subr.mxu0 %v1955
    %2117 = vmatpush2.msra.mxu0 %v1954
    %2118 = vmatprep.subr.mxu0 %v1953
    %2119 = vmatpush2.msra.mxu0 %v1952
    %2120 = vmatprep.subr.mxu0 %v1951
    %2121 = vmatpush2.msra.mxu0 %v1950
    %2122 = vmatprep.mubr.f32.mxu0 %v1791
    %2123 = vmatmul.mubr.f32.gmra.mxu0 %v1790
    %v2124 = vpop.f32.mrf.mxu0
    %v2125 = vadd.f32 %v2051, %v2124
    %v2126 = vpop.f32.mrf.mxu0
    %v2127 = vadd.f32 %v2055, %v2126
    %2128 = vmatprep.mubr.f32.mxu0 %v1795
    %2129 = vmatmul.mubr.f32.gmra.mxu0 %v1794
    %v2130 = vpop.f32.mrf.mxu0
    %v2131 = vadd.f32 %v2051, %v2130
    %v2132 = vpop.f32.mrf.mxu0
    %v2133 = vadd.f32 %v2055, %v2132
    %2134 = vmatprep.mubr.f32.mxu0 %v1799
    %2135 = vmatmul.mubr.f32.gmra.mxu0 %v1798
    %v2136 = vpop.f32.mrf.mxu0
    %v2137 = vadd.f32 %v2051, %v2136
    %v2138 = vpop.f32.mrf.mxu0
    %v2139 = vadd.f32 %v2055, %v2138
    %2140 = vmatprep.mubr.f32.mxu0 %v1803
    %2141 = vmatmul.mubr.f32.gmra.mxu0 %v1802
    %v2142 = vpop.f32.mrf.mxu0
    %v2143 = vadd.f32 %v2051, %v2142
    %v2144 = vpop.f32.mrf.mxu0
    %v2145 = vadd.f32 %v2055, %v2144
    %2146 = vmatprep.mubr.f32.mxu0 %v1807
    %2147 = vmatmul.mubr.f32.gmra.mxu0 %v1806
    %v2148 = vpop.f32.mrf.mxu0
    %v2149 = vadd.f32 %v2051, %v2148
    %v2150 = vpop.f32.mrf.mxu0
    %v2151 = vadd.f32 %v2055, %v2150
    %2152 = vmatprep.mubr.f32.mxu0 %v1811
    %2153 = vmatmul.mubr.f32.gmra.mxu0 %v1810
    %v2154 = vpop.f32.mrf.mxu0
    %v2155 = vadd.f32 %v2051, %v2154
    %v2156 = vpop.f32.mrf.mxu0
    %v2157 = vadd.f32 %v2055, %v2156
    %2158 = vmatprep.mubr.f32.mxu0 %v1815
    %2159 = vmatmul.mubr.f32.gmra.mxu0 %v1814
    %v2160 = vpop.f32.mrf.mxu0
    %v2161 = vadd.f32 %v2051, %v2160
    %v2162 = vpop.f32.mrf.mxu0
    %v2163 = vadd.f32 %v2055, %v2162
    %2164 = vmatprep.mubr.f32.mxu0 %v1819
    %2165 = vmatmul.mubr.f32.gmra.mxu0 %v1818
    %v2166 = vpop.f32.mrf.mxu0
    %v2167 = vadd.f32 %v2051, %v2166
    %v2168 = vpop.f32.mrf.mxu0
    %v2169 = vadd.f32 %v2055, %v2168
    %2170 = vmatprep.mubr.f32.mxu0 %v1823
    %2171 = vmatmul.mubr.f32.gmra.mxu0 %v1822
    %v2172 = vpop.f32.mrf.mxu0
    %v2173 = vadd.f32 %v2051, %v2172
    %v2174 = vpop.f32.mrf.mxu0
    %v2175 = vadd.f32 %v2055, %v2174
    %2176 = vmatprep.mubr.f32.mxu0 %v1827
    %2177 = vmatmul.mubr.f32.gmra.mxu0 %v1826
    %v2178 = vpop.f32.mrf.mxu0
    %v2179 = vadd.f32 %v2051, %v2178
    %v2180 = vpop.f32.mrf.mxu0
    %v2181 = vadd.f32 %v2055, %v2180
    %2182 = vmatprep.mubr.f32.mxu0 %v1831
    %2183 = vmatmul.mubr.f32.gmra.mxu0 %v1830
    %v2184 = vpop.f32.mrf.mxu0
    %v2185 = vadd.f32 %v2051, %v2184
    %v2186 = vpop.f32.mrf.mxu0
    %v2187 = vadd.f32 %v2055, %v2186
    %2188 = vmatprep.mubr.f32.mxu0 %v1835
    %2189 = vmatmul.mubr.f32.gmra.mxu0 %v1834
    %v2190 = vpop.f32.mrf.mxu0
    %v2191 = vadd.f32 %v2051, %v2190
    %v2192 = vpop.f32.mrf.mxu0
    %v2193 = vadd.f32 %v2055, %v2192
    %2194 = vmatprep.mubr.f32.mxu0 %v1839
    %2195 = vmatmul.mubr.f32.gmra.mxu0 %v1838
    %v2196 = vpop.f32.mrf.mxu0
    %v2197 = vadd.f32 %v2051, %v2196
    %v2198 = vpop.f32.mrf.mxu0
    %v2199 = vadd.f32 %v2055, %v2198
    %2200 = vmatprep.mubr.f32.mxu0 %v1843
    %2201 = vmatmul.mubr.f32.gmra.mxu0 %v1842
    %v2202 = vpop.f32.mrf.mxu0
    %v2203 = vadd.f32 %v2051, %v2202
    %v2204 = vpop.f32.mrf.mxu0
    %v2205 = vadd.f32 %v2055, %v2204
    %2206 = vmatprep.mubr.f32.mxu0 %v1847
    %2207 = vmatmul.mubr.f32.gmra.mxu0 %v1846
    %v2208 = vpop.f32.mrf.mxu0
    %v2209 = vadd.f32 %v2051, %v2208
    %v2210 = vpop.f32.mrf.mxu0
    %v2211 = vadd.f32 %v2055, %v2210
    %2212 = vmatprep.mubr.f32.mxu0 %v1851
    %2213 = vmatmul.mubr.f32.gmra.mxu0 %v1850
    %v2214 = vpop.f32.mrf.mxu0
    %v2215 = vadd.f32 %v2051, %v2214
    %v2216 = vpop.f32.mrf.mxu0
    %v2217 = vadd.f32 %v2055, %v2216
    %2218 = vmatprep.mubr.f32.mxu0 %v1855
    %2219 = vmatmul.mubr.f32.gmra.mxu0 %v1854
    %v2220 = vpop.f32.mrf.mxu0
    %v2221 = vadd.f32 %v2051, %v2220
    %v2222 = vpop.f32.mrf.mxu0
    %v2223 = vadd.f32 %v2055, %v2222
    %2224 = vmatprep.mubr.f32.mxu0 %v1859
    %2225 = vmatmul.mubr.f32.gmra.mxu0 %v1858
    %v2226 = vpop.f32.mrf.mxu0
    %v2227 = vadd.f32 %v2051, %v2226
    %v2228 = vpop.f32.mrf.mxu0
    %v2229 = vadd.f32 %v2055, %v2228
    %2230 = vmatprep.mubr.f32.mxu0 %v1863
    %2231 = vmatmul.mubr.f32.gmra.mxu0 %v1862
    %v2232 = vpop.f32.mrf.mxu0
    %v2233 = vadd.f32 %v2051, %v2232
    %v2234 = vpop.f32.mrf.mxu0
    %v2235 = vadd.f32 %v2055, %v2234
    %2236 = vmatprep.mubr.f32.mxu0 %v1867
    %2237 = vmatmul.mubr.f32.gmra.mxu0 %v1866
    %v2238 = vpop.f32.mrf.mxu0
    %v2239 = vadd.f32 %v2051, %v2238
    %v2240 = vpop.f32.mrf.mxu0
    %v2241 = vadd.f32 %v2055, %v2240
    %2242 = vmatprep.mubr.f32.mxu0 %v1871
    %2243 = vmatmul.mubr.f32.gmra.mxu0 %v1870
    %v2244 = vpop.f32.mrf.mxu0
    %v2245 = vadd.f32 %v2051, %v2244
    %v2246 = vpop.f32.mrf.mxu0
    %v2247 = vadd.f32 %v2055, %v2246
    %2248 = vmatprep.mubr.f32.mxu0 %v1875
    %2249 = vmatmul.mubr.f32.gmra.mxu0 %v1874
    %v2250 = vpop.f32.mrf.mxu0
    %v2251 = vadd.f32 %v2051, %v2250
    %v2252 = vpop.f32.mrf.mxu0
    %v2253 = vadd.f32 %v2055, %v2252
    %2254 = vmatprep.mubr.f32.mxu0 %v1879
    %2255 = vmatmul.mubr.f32.gmra.mxu0 %v1878
    %v2256 = vpop.f32.mrf.mxu0
    %v2257 = vadd.f32 %v2051, %v2256
    %v2258 = vpop.f32.mrf.mxu0
    %v2259 = vadd.f32 %v2055, %v2258
    %2260 = vmatprep.mubr.f32.mxu0 %v1883
    %2261 = vmatmul.mubr.f32.gmra.mxu0 %v1882
    %v2262 = vpop.f32.mrf.mxu0
    %v2263 = vadd.f32 %v2051, %v2262
    %v2264 = vpop.f32.mrf.mxu0
    %v2265 = vadd.f32 %v2055, %v2264
    %2266 = vmatprep.mubr.f32.mxu0 %v1887
    %2267 = vmatmul.mubr.f32.gmra.mxu0 %v1886
    %v2268 = vpop.f32.mrf.mxu0
    %v2269 = vadd.f32 %v2051, %v2268
    %v2270 = vpop.f32.mrf.mxu0
    %v2271 = vadd.f32 %v2055, %v2270
    %2272 = vmatprep.mubr.f32.mxu0 %v1891
    %2273 = vmatmul.mubr.f32.gmra.mxu0 %v1890
    %v2274 = vpop.f32.mrf.mxu0
    %v2275 = vadd.f32 %v2051, %v2274
    %v2276 = vpop.f32.mrf.mxu0
    %v2277 = vadd.f32 %v2055, %v2276
    %2278 = vmatprep.mubr.f32.mxu0 %v1895
    %2279 = vmatmul.mubr.f32.gmra.mxu0 %v1894
    %v2280 = vpop.f32.mrf.mxu0
    %v2281 = vadd.f32 %v2051, %v2280
    %v2282 = vpop.f32.mrf.mxu0
    %v2283 = vadd.f32 %v2055, %v2282
    %2284 = vmatprep.mubr.f32.mxu0 %v1899
    %2285 = vmatmul.mubr.f32.gmra.mxu0 %v1898
    %v2286 = vpop.f32.mrf.mxu0
    %v2287 = vadd.f32 %v2051, %v2286
    %v2288 = vpop.f32.mrf.mxu0
    %v2289 = vadd.f32 %v2055, %v2288
    %2290 = vmatprep.mubr.f32.mxu0 %v1903
    %2291 = vmatmul.mubr.f32.gmra.mxu0 %v1902
    %v2292 = vpop.f32.mrf.mxu0
    %v2293 = vadd.f32 %v2051, %v2292
    %v2294 = vpop.f32.mrf.mxu0
    %v2295 = vadd.f32 %v2055, %v2294
    %2296 = vmatprep.mubr.f32.mxu0 %v1907
    %2297 = vmatmul.mubr.f32.gmra.mxu0 %v1906
    %v2298 = vpop.f32.mrf.mxu0
    %v2299 = vadd.f32 %v2051, %v2298
    %v2300 = vpop.f32.mrf.mxu0
    %v2301 = vadd.f32 %v2055, %v2300
    %2302 = vmatprep.mubr.f32.mxu0 %v1911
    %2303 = vmatmul.mubr.f32.gmra.mxu0 %v1910
    %v2304 = vpop.f32.mrf.mxu0
    %v2305 = vadd.f32 %v2051, %v2304
    %v2306 = vpop.f32.mrf.mxu0
    %v2307 = vadd.f32 %v2055, %v2306
    %2308 = vmatprep.mubr.f32.mxu0 %v1915
    %2309 = vmatmul.mubr.f32.gmra.mxu0 %v1914
    %v2310 = vpop.f32.mrf.mxu0
    %v2311 = vadd.f32 %v2051, %v2310
    %v2312 = vpop.f32.mrf.mxu0
    %v2313 = vadd.f32 %v2055, %v2312
    %2314 = vdwg.mxu0
    %2315 = vmatprep.subr.mxu0 %v2013
    %2316 = vmatpush1.msra.mxu0 %v2012
    %2317 = vmatprep.subr.mxu0 %v2011
    %2318 = vmatpush1.msra.mxu0 %v2010
    %2319 = vmatprep.subr.mxu0 %v2009
    %2320 = vmatpush1.msra.mxu0 %v2008
    %2321 = vmatprep.subr.mxu0 %v2007
    %2322 = vmatpush1.msra.mxu0 %v2006
    %2323 = vmatprep.subr.mxu0 %v2005
    %2324 = vmatpush1.msra.mxu0 %v2004
    %2325 = vmatprep.subr.mxu0 %v2003
    %2326 = vmatpush1.msra.mxu0 %v2002
    %2327 = vmatprep.subr.mxu0 %v2001
    %2328 = vmatpush1.msra.mxu0 %v2000
    %2329 = vmatprep.subr.mxu0 %v1999
    %2330 = vmatpush1.msra.mxu0 %v1998
    %2331 = vmatprep.subr.mxu0 %v1997
    %2332 = vmatpush1.msra.mxu0 %v1996
    %2333 = vmatprep.subr.mxu0 %v1995
    %2334 = vmatpush1.msra.mxu0 %v1994
    %2335 = vmatprep.subr.mxu0 %v1993
    %2336 = vmatpush1.msra.mxu0 %v1992
    %2337 = vmatprep.subr.mxu0 %v1991
    %2338 = vmatpush1.msra.mxu0 %v1990
    %2339 = vmatprep.subr.mxu0 %v1989
    %2340 = vmatpush1.msra.mxu0 %v1988
    %2341 = vmatprep.subr.mxu0 %v1987
    %2342 = vmatpush1.msra.mxu0 %v1986
    %2343 = vmatprep.subr.mxu0 %v1985
    %2344 = vmatpush1.msra.mxu0 %v1984
    %2345 = vmatprep.subr.mxu0 %v1983
    %2346 = vmatpush1.msra.mxu0 %v1982
    %2347 = vmatprep.subr.mxu0 %v2045
    %2348 = vmatpush2.msra.mxu0 %v2044
    %2349 = vmatprep.subr.mxu0 %v2043
    %2350 = vmatpush2.msra.mxu0 %v2042
    %2351 = vmatprep.subr.mxu0 %v2041
    %2352 = vmatpush2.msra.mxu0 %v2040
    %2353 = vmatprep.subr.mxu0 %v2039
    %2354 = vmatpush2.msra.mxu0 %v2038
    %2355 = vmatprep.subr.mxu0 %v2037
    %2356 = vmatpush2.msra.mxu0 %v2036
    %2357 = vmatprep.subr.mxu0 %v2035
    %2358 = vmatpush2.msra.mxu0 %v2034
    %2359 = vmatprep.subr.mxu0 %v2033
    %2360 = vmatpush2.msra.mxu0 %v2032
    %2361 = vmatprep.subr.mxu0 %v2031
    %2362 = vmatpush2.msra.mxu0 %v2030
    %2363 = vmatprep.subr.mxu0 %v2029
    %2364 = vmatpush2.msra.mxu0 %v2028
    %2365 = vmatprep.subr.mxu0 %v2027
    %2366 = vmatpush2.msra.mxu0 %v2026
    %2367 = vmatprep.subr.mxu0 %v2025
    %2368 = vmatpush2.msra.mxu0 %v2024
    %2369 = vmatprep.subr.mxu0 %v2023
    %2370 = vmatpush2.msra.mxu0 %v2022
    %2371 = vmatprep.subr.mxu0 %v2021
    %2372 = vmatpush2.msra.mxu0 %v2020
    %2373 = vmatprep.subr.mxu0 %v2019
    %2374 = vmatpush2.msra.mxu0 %v2018
    %2375 = vmatprep.subr.mxu0 %v2017
    %2376 = vmatpush2.msra.mxu0 %v2016
    %2377 = vmatprep.subr.mxu0 %v2015
    %2378 = vmatpush2.msra.mxu0 %v2014
    %2379 = vmatprep.mubr.f32.mxu0 %v1793
    %2380 = vmatmul.mubr.f32.gmra.mxu0 %v1792
    %v2381 = vpop.f32.mrf.mxu0
    %v2382 = vadd.f32 %v2125, %v2381
    %v2383 = vpop.f32.mrf.mxu0
    %v2384 = vadd.f32 %v2127, %v2383
    %2385 = vmatprep.mubr.f32.mxu0 %v1797
    %2386 = vmatmul.mubr.f32.gmra.mxu0 %v1796
    %v2387 = vpop.f32.mrf.mxu0
    %v2388 = vadd.f32 %v2131, %v2387
    %v2389 = vpop.f32.mrf.mxu0
    %v2390 = vadd.f32 %v2133, %v2389
    %2391 = vmatprep.mubr.f32.mxu0 %v1801
    %2392 = vmatmul.mubr.f32.gmra.mxu0 %v1800
    %v2393 = vpop.f32.mrf.mxu0
    %v2394 = vadd.f32 %v2137, %v2393
    %v2395 = vpop.f32.mrf.mxu0
    %v2396 = vadd.f32 %v2139, %v2395
    %2397 = vmatprep.mubr.f32.mxu0 %v1805
    %2398 = vmatmul.mubr.f32.gmra.mxu0 %v1804
    %v2399 = vpop.f32.mrf.mxu0
    %v2400 = vadd.f32 %v2143, %v2399
    %v2401 = vpop.f32.mrf.mxu0
    %v2402 = vadd.f32 %v2145, %v2401
    %2403 = vmatprep.mubr.f32.mxu0 %v1809
    %2404 = vmatmul.mubr.f32.gmra.mxu0 %v1808
    %v2405 = vpop.f32.mrf.mxu0
    %v2406 = vadd.f32 %v2149, %v2405
    %v2407 = vpop.f32.mrf.mxu0
    %v2408 = vadd.f32 %v2151, %v2407
    %2409 = vmatprep.mubr.f32.mxu0 %v1813
    %2410 = vmatmul.mubr.f32.gmra.mxu0 %v1812
    %v2411 = vpop.f32.mrf.mxu0
    %v2412 = vadd.f32 %v2155, %v2411
    %v2413 = vpop.f32.mrf.mxu0
    %v2414 = vadd.f32 %v2157, %v2413
    %2415 = vmatprep.mubr.f32.mxu0 %v1817
    %2416 = vmatmul.mubr.f32.gmra.mxu0 %v1816
    %v2417 = vpop.f32.mrf.mxu0
    %v2418 = vadd.f32 %v2161, %v2417
    %v2419 = vpop.f32.mrf.mxu0
    %v2420 = vadd.f32 %v2163, %v2419
    %2421 = vmatprep.mubr.f32.mxu0 %v1821
    %2422 = vmatmul.mubr.f32.gmra.mxu0 %v1820
    %v2423 = vpop.f32.mrf.mxu0
    %v2424 = vadd.f32 %v2167, %v2423
    %v2425 = vpop.f32.mrf.mxu0
    %v2426 = vadd.f32 %v2169, %v2425
    %2427 = vmatprep.mubr.f32.mxu0 %v1825
    %2428 = vmatmul.mubr.f32.gmra.mxu0 %v1824
    %v2429 = vpop.f32.mrf.mxu0
    %v2430 = vadd.f32 %v2173, %v2429
    %v2431 = vpop.f32.mrf.mxu0
    %v2432 = vadd.f32 %v2175, %v2431
    %2433 = vmatprep.mubr.f32.mxu0 %v1829
    %2434 = vmatmul.mubr.f32.gmra.mxu0 %v1828
    %v2435 = vpop.f32.mrf.mxu0
    %v2436 = vadd.f32 %v2179, %v2435
    %v2437 = vpop.f32.mrf.mxu0
    %v2438 = vadd.f32 %v2181, %v2437
    %2439 = vmatprep.mubr.f32.mxu0 %v1833
    %2440 = vmatmul.mubr.f32.gmra.mxu0 %v1832
    %v2441 = vpop.f32.mrf.mxu0
    %v2442 = vadd.f32 %v2185, %v2441
    %v2443 = vpop.f32.mrf.mxu0
    %v2444 = vadd.f32 %v2187, %v2443
    %2445 = vmatprep.mubr.f32.mxu0 %v1837
    %2446 = vmatmul.mubr.f32.gmra.mxu0 %v1836
    %v2447 = vpop.f32.mrf.mxu0
    %v2448 = vadd.f32 %v2191, %v2447
    %v2449 = vpop.f32.mrf.mxu0
    %v2450 = vadd.f32 %v2193, %v2449
    %2451 = vmatprep.mubr.f32.mxu0 %v1841
    %2452 = vmatmul.mubr.f32.gmra.mxu0 %v1840
    %v2453 = vpop.f32.mrf.mxu0
    %v2454 = vadd.f32 %v2197, %v2453
    %v2455 = vpop.f32.mrf.mxu0
    %v2456 = vadd.f32 %v2199, %v2455
    %2457 = vmatprep.mubr.f32.mxu0 %v1845
    %2458 = vmatmul.mubr.f32.gmra.mxu0 %v1844
    %v2459 = vpop.f32.mrf.mxu0
    %v2460 = vadd.f32 %v2203, %v2459
    %v2461 = vpop.f32.mrf.mxu0
    %v2462 = vadd.f32 %v2205, %v2461
    %2463 = vmatprep.mubr.f32.mxu0 %v1849
    %2464 = vmatmul.mubr.f32.gmra.mxu0 %v1848
    %v2465 = vpop.f32.mrf.mxu0
    %v2466 = vadd.f32 %v2209, %v2465
    %v2467 = vpop.f32.mrf.mxu0
    %v2468 = vadd.f32 %v2211, %v2467
    %2469 = vmatprep.mubr.f32.mxu0 %v1853
    %2470 = vmatmul.mubr.f32.gmra.mxu0 %v1852
    %v2471 = vpop.f32.mrf.mxu0
    %v2472 = vadd.f32 %v2215, %v2471
    %v2473 = vpop.f32.mrf.mxu0
    %v2474 = vadd.f32 %v2217, %v2473
    %2475 = vmatprep.mubr.f32.mxu0 %v1857
    %2476 = vmatmul.mubr.f32.gmra.mxu0 %v1856
    %v2477 = vpop.f32.mrf.mxu0
    %v2478 = vadd.f32 %v2221, %v2477
    %v2479 = vpop.f32.mrf.mxu0
    %v2480 = vadd.f32 %v2223, %v2479
    %2481 = vmatprep.mubr.f32.mxu0 %v1861
    %2482 = vmatmul.mubr.f32.gmra.mxu0 %v1860
    %v2483 = vpop.f32.mrf.mxu0
    %v2484 = vadd.f32 %v2227, %v2483
    %v2485 = vpop.f32.mrf.mxu0
    %v2486 = vadd.f32 %v2229, %v2485
    %2487 = vmatprep.mubr.f32.mxu0 %v1865
    %2488 = vmatmul.mubr.f32.gmra.mxu0 %v1864
    %v2489 = vpop.f32.mrf.mxu0
    %v2490 = vadd.f32 %v2233, %v2489
    %v2491 = vpop.f32.mrf.mxu0
    %v2492 = vadd.f32 %v2235, %v2491
    %2493 = vmatprep.mubr.f32.mxu0 %v1869
    %2494 = vmatmul.mubr.f32.gmra.mxu0 %v1868
    %v2495 = vpop.f32.mrf.mxu0
    %v2496 = vadd.f32 %v2239, %v2495
    %v2497 = vpop.f32.mrf.mxu0
    %v2498 = vadd.f32 %v2241, %v2497
    %2499 = vmatprep.mubr.f32.mxu0 %v1873
    %2500 = vmatmul.mubr.f32.gmra.mxu0 %v1872
    %v2501 = vpop.f32.mrf.mxu0
    %v2502 = vadd.f32 %v2245, %v2501
    %v2503 = vpop.f32.mrf.mxu0
    %v2504 = vadd.f32 %v2247, %v2503
    %2505 = vmatprep.mubr.f32.mxu0 %v1877
    %2506 = vmatmul.mubr.f32.gmra.mxu0 %v1876
    %v2507 = vpop.f32.mrf.mxu0
    %v2508 = vadd.f32 %v2251, %v2507
    %v2509 = vpop.f32.mrf.mxu0
    %v2510 = vadd.f32 %v2253, %v2509
    %2511 = vmatprep.mubr.f32.mxu0 %v1881
    %2512 = vmatmul.mubr.f32.gmra.mxu0 %v1880
    %v2513 = vpop.f32.mrf.mxu0
    %v2514 = vadd.f32 %v2257, %v2513
    %v2515 = vpop.f32.mrf.mxu0
    %v2516 = vadd.f32 %v2259, %v2515
    %2517 = vmatprep.mubr.f32.mxu0 %v1885
    %2518 = vmatmul.mubr.f32.gmra.mxu0 %v1884
    %v2519 = vpop.f32.mrf.mxu0
    %v2520 = vadd.f32 %v2263, %v2519
    %v2521 = vpop.f32.mrf.mxu0
    %v2522 = vadd.f32 %v2265, %v2521
    %2523 = vmatprep.mubr.f32.mxu0 %v1889
    %2524 = vmatmul.mubr.f32.gmra.mxu0 %v1888
    %v2525 = vpop.f32.mrf.mxu0
    %v2526 = vadd.f32 %v2269, %v2525
    %v2527 = vpop.f32.mrf.mxu0
    %v2528 = vadd.f32 %v2271, %v2527
    %2529 = vmatprep.mubr.f32.mxu0 %v1893
    %2530 = vmatmul.mubr.f32.gmra.mxu0 %v1892
    %v2531 = vpop.f32.mrf.mxu0
    %v2532 = vadd.f32 %v2275, %v2531
    %v2533 = vpop.f32.mrf.mxu0
    %v2534 = vadd.f32 %v2277, %v2533
    %2535 = vmatprep.mubr.f32.mxu0 %v1897
    %2536 = vmatmul.mubr.f32.gmra.mxu0 %v1896
    %v2537 = vpop.f32.mrf.mxu0
    %v2538 = vadd.f32 %v2281, %v2537
    %v2539 = vpop.f32.mrf.mxu0
    %v2540 = vadd.f32 %v2283, %v2539
    %2541 = vmatprep.mubr.f32.mxu0 %v1901
    %2542 = vmatmul.mubr.f32.gmra.mxu0 %v1900
    %v2543 = vpop.f32.mrf.mxu0
    %v2544 = vadd.f32 %v2287, %v2543
    %v2545 = vpop.f32.mrf.mxu0
    %v2546 = vadd.f32 %v2289, %v2545
    %2547 = vmatprep.mubr.f32.mxu0 %v1905
    %2548 = vmatmul.mubr.f32.gmra.mxu0 %v1904
    %v2549 = vpop.f32.mrf.mxu0
    %v2550 = vadd.f32 %v2293, %v2549
    %v2551 = vpop.f32.mrf.mxu0
    %v2552 = vadd.f32 %v2295, %v2551
    %2553 = vmatprep.mubr.f32.mxu0 %v1909
    %2554 = vmatmul.mubr.f32.gmra.mxu0 %v1908
    %v2555 = vpop.f32.mrf.mxu0
    %v2556 = vadd.f32 %v2299, %v2555
    %v2557 = vpop.f32.mrf.mxu0
    %v2558 = vadd.f32 %v2301, %v2557
    %2559 = vmatprep.mubr.f32.mxu0 %v1913
    %2560 = vmatmul.mubr.f32.gmra.mxu0 %v1912
    %v2561 = vpop.f32.mrf.mxu0
    %v2562 = vadd.f32 %v2305, %v2561
    %v2563 = vpop.f32.mrf.mxu0
    %v2564 = vadd.f32 %v2307, %v2563
    %2565 = vmatprep.mubr.f32.mxu0 %v1917
    %2566 = vmatmul.mubr.f32.gmra.mxu0 %v1916
    %v2567 = vpop.f32.mrf.mxu0
    %v2568 = vadd.f32 %v2311, %v2567
    %v2569 = vpop.f32.mrf.mxu0
    %v2570 = vadd.f32 %v2313, %v2569
    %2571 = vdwg.mxu0
    %v2572 = vmul.f32 %v2382, 0.2
    %v2573 = vmul.f32 %v2384, 0.2
    %v2574 = vmul.f32 %v2388, 0.2
    %v2575 = vmul.f32 %v2390, 0.2
    %v2576 = vmul.f32 %v2394, 0.2
    %v2577 = vmul.f32 %v2396, 0.2
    %v2578 = vmul.f32 %v2400, 0.2
    %v2579 = vmul.f32 %v2402, 0.2
    %v2580 = vmul.f32 %v2406, 0.2
    %v2581 = vmul.f32 %v2408, 0.2
    %v2582 = vmul.f32 %v2412, 0.2
    %v2583 = vmul.f32 %v2414, 0.2
    %v2584 = vmul.f32 %v2418, 0.2
    %v2585 = vmul.f32 %v2420, 0.2
    %v2586 = vmul.f32 %v2424, 0.2
    %v2587 = vmul.f32 %v2426, 0.2
    %v2588 = vmul.f32 %v2430, 0.2
    %v2589 = vmul.f32 %v2432, 0.2
    %v2590 = vmul.f32 %v2436, 0.2
    %v2591 = vmul.f32 %v2438, 0.2
    %v2592 = vmul.f32 %v2442, 0.2
    %v2593 = vmul.f32 %v2444, 0.2
    %v2594 = vmul.f32 %v2448, 0.2
    %v2595 = vmul.f32 %v2450, 0.2
    %v2596 = vmul.f32 %v2454, 0.2
    %v2597 = vmul.f32 %v2456, 0.2
    %v2598 = vmul.f32 %v2460, 0.2
    %v2599 = vmul.f32 %v2462, 0.2
    %v2600 = vmul.f32 %v2466, 0.2
    %v2601 = vmul.f32 %v2468, 0.2
    %v2602 = vmul.f32 %v2472, 0.2
    %v2603 = vmul.f32 %v2474, 0.2
    %v2604 = vmul.f32 %v2478, 0.2
    %v2605 = vmul.f32 %v2480, 0.2
    %v2606 = vmul.f32 %v2484, 0.2
    %v2607 = vmul.f32 %v2486, 0.2
    %v2608 = vmul.f32 %v2490, 0.2
    %v2609 = vmul.f32 %v2492, 0.2
    %v2610 = vmul.f32 %v2496, 0.2
    %v2611 = vmul.f32 %v2498, 0.2
    %v2612 = vmul.f32 %v2502, 0.2
    %v2613 = vmul.f32 %v2504, 0.2
    %v2614 = vmul.f32 %v2508, 0.2
    %v2615 = vmul.f32 %v2510, 0.2
    %v2616 = vmul.f32 %v2514, 0.2
    %v2617 = vmul.f32 %v2516, 0.2
    %v2618 = vmul.f32 %v2520, 0.2
    %v2619 = vmul.f32 %v2522, 0.2
    %v2620 = vmul.f32 %v2526, 0.2
    %v2621 = vmul.f32 %v2528, 0.2
    %v2622 = vmul.f32 %v2532, 0.2
    %v2623 = vmul.f32 %v2534, 0.2
    %v2624 = vmul.f32 %v2538, 0.2
    %v2625 = vmul.f32 %v2540, 0.2
    %v2626 = vmul.f32 %v2544, 0.2
    %v2627 = vmul.f32 %v2546, 0.2
    %v2628 = vmul.f32 %v2550, 0.2
    %v2629 = vmul.f32 %v2552, 0.2
    %v2630 = vmul.f32 %v2556, 0.2
    %v2631 = vmul.f32 %v2558, 0.2
    %v2632 = vmul.f32 %v2562, 0.2
    %v2633 = vmul.f32 %v2564, 0.2
    %v2634 = vmul.f32 %v2568, 0.2
    %v2635 = vmul.f32 %v2570, 0.2
    %v2636 = vmax.f32 %v2382, %v2572
    %v2637 = vmax.f32 %v2384, %v2573
    %v2638 = vmax.f32 %v2388, %v2574
    %v2639 = vmax.f32 %v2390, %v2575
    %v2640 = vmax.f32 %v2394, %v2576
    %v2641 = vmax.f32 %v2396, %v2577
    %v2642 = vmax.f32 %v2400, %v2578
    %v2643 = vmax.f32 %v2402, %v2579
    %v2644 = vmax.f32 %v2406, %v2580
    %v2645 = vmax.f32 %v2408, %v2581
    %v2646 = vmax.f32 %v2412, %v2582
    %v2647 = vmax.f32 %v2414, %v2583
    %v2648 = vmax.f32 %v2418, %v2584
    %v2649 = vmax.f32 %v2420, %v2585
    %v2650 = vmax.f32 %v2424, %v2586
    %v2651 = vmax.f32 %v2426, %v2587
    %v2652 = vmax.f32 %v2430, %v2588
    %v2653 = vmax.f32 %v2432, %v2589
    %v2654 = vmax.f32 %v2436, %v2590
    %v2655 = vmax.f32 %v2438, %v2591
    %v2656 = vmax.f32 %v2442, %v2592
    %v2657 = vmax.f32 %v2444, %v2593
    %v2658 = vmax.f32 %v2448, %v2594
    %v2659 = vmax.f32 %v2450, %v2595
    %v2660 = vmax.f32 %v2454, %v2596
    %v2661 = vmax.f32 %v2456, %v2597
    %v2662 = vmax.f32 %v2460, %v2598
    %v2663 = vmax.f32 %v2462, %v2599
    %v2664 = vmax.f32 %v2466, %v2600
    %v2665 = vmax.f32 %v2468, %v2601
    %v2666 = vmax.f32 %v2472, %v2602
    %v2667 = vmax.f32 %v2474, %v2603
    %v2668 = vmax.f32 %v2478, %v2604
    %v2669 = vmax.f32 %v2480, %v2605
    %v2670 = vmax.f32 %v2484, %v2606
    %v2671 = vmax.f32 %v2486, %v2607
    %v2672 = vmax.f32 %v2490, %v2608
    %v2673 = vmax.f32 %v2492, %v2609
    %v2674 = vmax.f32 %v2496, %v2610
    %v2675 = vmax.f32 %v2498, %v2611
    %v2676 = vmax.f32 %v2502, %v2612
    %v2677 = vmax.f32 %v2504, %v2613
    %v2678 = vmax.f32 %v2508, %v2614
    %v2679 = vmax.f32 %v2510, %v2615
    %v2680 = vmax.f32 %v2514, %v2616
    %v2681 = vmax.f32 %v2516, %v2617
    %v2682 = vmax.f32 %v2520, %v2618
    %v2683 = vmax.f32 %v2522, %v2619
    %v2684 = vmax.f32 %v2526, %v2620
    %v2685 = vmax.f32 %v2528, %v2621
    %v2686 = vmax.f32 %v2532, %v2622
    %v2687 = vmax.f32 %v2534, %v2623
    %v2688 = vmax.f32 %v2538, %v2624
    %v2689 = vmax.f32 %v2540, %v2625
    %v2690 = vmax.f32 %v2544, %v2626
    %v2691 = vmax.f32 %v2546, %v2627
    %v2692 = vmax.f32 %v2550, %v2628
    %v2693 = vmax.f32 %v2552, %v2629
    %v2694 = vmax.f32 %v2556, %v2630
    %v2695 = vmax.f32 %v2558, %v2631
    %v2696 = vmax.f32 %v2562, %v2632
    %v2697 = vmax.f32 %v2564, %v2633
    %v2698 = vmax.f32 %v2568, %v2634
    %v2699 = vmax.f32 %v2570, %v2635
    %v2700 = vld [vmem:[%s6] sm:$0xff]
    %v2701 = vld [vmem:[%s6 + $0x8] sm:$0xff]
    %v2702 = vld [vmem:[%s6 + $0x10] sm:$0xff]
    %v2703 = vld [vmem:[%s6 + $0x18] sm:$0xff]
    %v2704 = vld [vmem:[%s6 + $0x20] sm:$0xff]
    %v2705 = vld [vmem:[%s6 + $0x28] sm:$0xff]
    %v2706 = vld [vmem:[%s6 + $0x30] sm:$0xff]
    %v2707 = vld [vmem:[%s6 + $0x38] sm:$0xff]
    %v2708 = vld [vmem:[%s6 + $0x40] sm:$0xff]
    %v2709 = vld [vmem:[%s6 + $0x48] sm:$0xff]
    %v2710 = vld [vmem:[%s6 + $0x50] sm:$0xff]
    %v2711 = vld [vmem:[%s6 + $0x58] sm:$0xff]
    %v2712 = vld [vmem:[%s6 + $0x60] sm:$0xff]
    %v2713 = vld [vmem:[%s6 + $0x68] sm:$0xff]
    %v2714 = vld [vmem:[%s6 + $0x70] sm:$0xff]
    %v2715 = vld [vmem:[%s6 + $0x78] sm:$0xff]
    %v2716 = vld [vmem:[%s6 + $0x80] sm:$0xff]
    %v2717 = vld [vmem:[%s6 + $0x88] sm:$0xff]
    %v2718 = vld [vmem:[%s6 + $0x90] sm:$0xff]
    %v2719 = vld [vmem:[%s6 + $0x98] sm:$0xff]
    %v2720 = vld [vmem:[%s6 + $0xa0] sm:$0xff]
    %v2721 = vld [vmem:[%s6 + $0xa8] sm:$0xff]
    %v2722 = vld [vmem:[%s6 + $0xb0] sm:$0xff]
    %v2723 = vld [vmem:[%s6 + $0xb8] sm:$0xff]
    %v2724 = vld [vmem:[%s6 + $0xc0] sm:$0xff]
    %v2725 = vld [vmem:[%s6 + $0xc8] sm:$0xff]
    %v2726 = vld [vmem:[%s6 + $0xd0] sm:$0xff]
    %v2727 = vld [vmem:[%s6 + $0xd8] sm:$0xff]
    %v2728 = vld [vmem:[%s6 + $0xe0] sm:$0xff]
    %v2729 = vld [vmem:[%s6 + $0xe8] sm:$0xff]
    %v2730 = vld [vmem:[%s6 + $0xf0] sm:$0xff]
    %v2731 = vld [vmem:[%s6 + $0xf8] sm:$0xff]
    %v2732 = vld [vmem:[%s7] sm:$0x1]
    %v2734 = vlaneseq
    %v2735 = vshrl.u32 %v2734, 7
    %v2736 = vsub.s32 0, %v2735
    %v2737 = vrot.slane %v2732, %v2736
    %2739 = vmatprep.subr.mxu0 0.0
    %2740 = vmatpush1.msra.mxu0 %v2715
    %2741 = vmatprep.subr.mxu0 0.0
    %2742 = vmatpush1.msra.mxu0 %v2714
    %2743 = vmatprep.subr.mxu0 0.0
    %2744 = vmatpush1.msra.mxu0 %v2713
    %2745 = vmatprep.subr.mxu0 0.0
    %2746 = vmatpush1.msra.mxu0 %v2712
    %2747 = vmatprep.subr.mxu0 0.0
    %2748 = vmatpush1.msra.mxu0 %v2711
    %2749 = vmatprep.subr.mxu0 0.0
    %2750 = vmatpush1.msra.mxu0 %v2710
    %2751 = vmatprep.subr.mxu0 0.0
    %2752 = vmatpush1.msra.mxu0 %v2709
    %2753 = vmatprep.subr.mxu0 0.0
    %2754 = vmatpush1.msra.mxu0 %v2708
    %2755 = vmatprep.subr.mxu0 0.0
    %2756 = vmatpush1.msra.mxu0 %v2707
    %2757 = vmatprep.subr.mxu0 0.0
    %2758 = vmatpush1.msra.mxu0 %v2706
    %2759 = vmatprep.subr.mxu0 0.0
    %2760 = vmatpush1.msra.mxu0 %v2705
    %2761 = vmatprep.subr.mxu0 0.0
    %2762 = vmatpush1.msra.mxu0 %v2704
    %2763 = vmatprep.subr.mxu0 0.0
    %2764 = vmatpush1.msra.mxu0 %v2703
    %2765 = vmatprep.subr.mxu0 0.0
    %2766 = vmatpush1.msra.mxu0 %v2702
    %2767 = vmatprep.subr.mxu0 0.0
    %2768 = vmatpush1.msra.mxu0 %v2701
    %2769 = vmatprep.subr.mxu0 0.0
    %2770 = vmatpush1.msra.mxu0 %v2700
    %2771 = vmatprep.subr.mxu0 0.0
    %2772 = vmatpush2.msra.mxu0 %v2731
    %2773 = vmatprep.subr.mxu0 0.0
    %2774 = vmatpush2.msra.mxu0 %v2730
    %2775 = vmatprep.subr.mxu0 0.0
    %2776 = vmatpush2.msra.mxu0 %v2729
    %2777 = vmatprep.subr.mxu0 0.0
    %2778 = vmatpush2.msra.mxu0 %v2728
    %2779 = vmatprep.subr.mxu0 0.0
    %2780 = vmatpush2.msra.mxu0 %v2727
    %2781 = vmatprep.subr.mxu0 0.0
    %2782 = vmatpush2.msra.mxu0 %v2726
    %2783 = vmatprep.subr.mxu0 0.0
    %2784 = vmatpush2.msra.mxu0 %v2725
    %2785 = vmatprep.subr.mxu0 0.0
    %2786 = vmatpush2.msra.mxu0 %v2724
    %2787 = vmatprep.subr.mxu0 0.0
    %2788 = vmatpush2.msra.mxu0 %v2723
    %2789 = vmatprep.subr.mxu0 0.0
    %2790 = vmatpush2.msra.mxu0 %v2722
    %2791 = vmatprep.subr.mxu0 0.0
    %2792 = vmatpush2.msra.mxu0 %v2721
    %2793 = vmatprep.subr.mxu0 0.0
    %2794 = vmatpush2.msra.mxu0 %v2720
    %2795 = vmatprep.subr.mxu0 0.0
    %2796 = vmatpush2.msra.mxu0 %v2719
    %2797 = vmatprep.subr.mxu0 0.0
    %2798 = vmatpush2.msra.mxu0 %v2718
    %2799 = vmatprep.subr.mxu0 0.0
    %2800 = vmatpush2.msra.mxu0 %v2717
    %2801 = vmatprep.subr.mxu0 0.0
    %2802 = vmatpush2.msra.mxu0 %v2716
    %2803 = vmatprep.mubr.f32.mxu0 %v2637
    %2804 = vmatmul.mubr.f32.gmra.mxu0 %v2636
    %v2805 = vpop.f32.mrf.mxu0
    %v2806 = vadd.f32 %v2737, %v2805
    %v2807 = vpop.f32.mrf.mxu0
    %2808 = vmatprep.mubr.f32.mxu0 %v2639
    %2809 = vmatmul.mubr.f32.gmra.mxu0 %v2638
    %v2810 = vpop.f32.mrf.mxu0
    %v2811 = vadd.f32 %v2737, %v2810
    %v2812 = vpop.f32.mrf.mxu0
    %2813 = vmatprep.mubr.f32.mxu0 %v2641
    %2814 = vmatmul.mubr.f32.gmra.mxu0 %v2640
    %v2815 = vpop.f32.mrf.mxu0
    %v2816 = vadd.f32 %v2737, %v2815
    %v2817 = vpop.f32.mrf.mxu0
    %2818 = vmatprep.mubr.f32.mxu0 %v2643
    %2819 = vmatmul.mubr.f32.gmra.mxu0 %v2642
    %v2820 = vpop.f32.mrf.mxu0
    %v2821 = vadd.f32 %v2737, %v2820
    %v2822 = vpop.f32.mrf.mxu0
    %2823 = vmatprep.mubr.f32.mxu0 %v2645
    %2824 = vmatmul.mubr.f32.gmra.mxu0 %v2644
    %v2825 = vpop.f32.mrf.mxu0
    %v2826 = vadd.f32 %v2737, %v2825
    %v2827 = vpop.f32.mrf.mxu0
    %2828 = vmatprep.mubr.f32.mxu0 %v2647
    %2829 = vmatmul.mubr.f32.gmra.mxu0 %v2646
    %v2830 = vpop.f32.mrf.mxu0
    %v2831 = vadd.f32 %v2737, %v2830
    %v2832 = vpop.f32.mrf.mxu0
    %2833 = vmatprep.mubr.f32.mxu0 %v2649
    %2834 = vmatmul.mubr.f32.gmra.mxu0 %v2648
    %v2835 = vpop.f32.mrf.mxu0
    %v2836 = vadd.f32 %v2737, %v2835
    %v2837 = vpop.f32.mrf.mxu0
    %2838 = vmatprep.mubr.f32.mxu0 %v2651
    %2839 = vmatmul.mubr.f32.gmra.mxu0 %v2650
    %v2840 = vpop.f32.mrf.mxu0
    %v2841 = vadd.f32 %v2737, %v2840
    %v2842 = vpop.f32.mrf.mxu0
    %2843 = vmatprep.mubr.f32.mxu0 %v2653
    %2844 = vmatmul.mubr.f32.gmra.mxu0 %v2652
    %v2845 = vpop.f32.mrf.mxu0
    %v2846 = vadd.f32 %v2737, %v2845
    %v2847 = vpop.f32.mrf.mxu0
    %2848 = vmatprep.mubr.f32.mxu0 %v2655
    %2849 = vmatmul.mubr.f32.gmra.mxu0 %v2654
    %v2850 = vpop.f32.mrf.mxu0
    %v2851 = vadd.f32 %v2737, %v2850
    %v2852 = vpop.f32.mrf.mxu0
    %2853 = vmatprep.mubr.f32.mxu0 %v2657
    %2854 = vmatmul.mubr.f32.gmra.mxu0 %v2656
    %v2855 = vpop.f32.mrf.mxu0
    %v2856 = vadd.f32 %v2737, %v2855
    %v2857 = vpop.f32.mrf.mxu0
    %2858 = vmatprep.mubr.f32.mxu0 %v2659
    %2859 = vmatmul.mubr.f32.gmra.mxu0 %v2658
    %v2860 = vpop.f32.mrf.mxu0
    %v2861 = vadd.f32 %v2737, %v2860
    %v2862 = vpop.f32.mrf.mxu0
    %2863 = vmatprep.mubr.f32.mxu0 %v2661
    %2864 = vmatmul.mubr.f32.gmra.mxu0 %v2660
    %v2865 = vpop.f32.mrf.mxu0
    %v2866 = vadd.f32 %v2737, %v2865
    %v2867 = vpop.f32.mrf.mxu0
    %2868 = vmatprep.mubr.f32.mxu0 %v2663
    %2869 = vmatmul.mubr.f32.gmra.mxu0 %v2662
    %v2870 = vpop.f32.mrf.mxu0
    %v2871 = vadd.f32 %v2737, %v2870
    %v2872 = vpop.f32.mrf.mxu0
    %2873 = vmatprep.mubr.f32.mxu0 %v2665
    %2874 = vmatmul.mubr.f32.gmra.mxu0 %v2664
    %v2875 = vpop.f32.mrf.mxu0
    %v2876 = vadd.f32 %v2737, %v2875
    %v2877 = vpop.f32.mrf.mxu0
    %2878 = vmatprep.mubr.f32.mxu0 %v2667
    %2879 = vmatmul.mubr.f32.gmra.mxu0 %v2666
    %v2880 = vpop.f32.mrf.mxu0
    %v2881 = vadd.f32 %v2737, %v2880
    %v2882 = vpop.f32.mrf.mxu0
    %2883 = vmatprep.mubr.f32.mxu0 %v2669
    %2884 = vmatmul.mubr.f32.gmra.mxu0 %v2668
    %v2885 = vpop.f32.mrf.mxu0
    %v2886 = vadd.f32 %v2737, %v2885
    %v2887 = vpop.f32.mrf.mxu0
    %2888 = vmatprep.mubr.f32.mxu0 %v2671
    %2889 = vmatmul.mubr.f32.gmra.mxu0 %v2670
    %v2890 = vpop.f32.mrf.mxu0
    %v2891 = vadd.f32 %v2737, %v2890
    %v2892 = vpop.f32.mrf.mxu0
    %2893 = vmatprep.mubr.f32.mxu0 %v2673
    %2894 = vmatmul.mubr.f32.gmra.mxu0 %v2672
    %v2895 = vpop.f32.mrf.mxu0
    %v2896 = vadd.f32 %v2737, %v2895
    %v2897 = vpop.f32.mrf.mxu0
    %2898 = vmatprep.mubr.f32.mxu0 %v2675
    %2899 = vmatmul.mubr.f32.gmra.mxu0 %v2674
    %v2900 = vpop.f32.mrf.mxu0
    %v2901 = vadd.f32 %v2737, %v2900
    %v2902 = vpop.f32.mrf.mxu0
    %2903 = vmatprep.mubr.f32.mxu0 %v2677
    %2904 = vmatmul.mubr.f32.gmra.mxu0 %v2676
    %v2905 = vpop.f32.mrf.mxu0
    %v2906 = vadd.f32 %v2737, %v2905
    %v2907 = vpop.f32.mrf.mxu0
    %2908 = vmatprep.mubr.f32.mxu0 %v2679
    %2909 = vmatmul.mubr.f32.gmra.mxu0 %v2678
    %v2910 = vpop.f32.mrf.mxu0
    %v2911 = vadd.f32 %v2737, %v2910
    %v2912 = vpop.f32.mrf.mxu0
    %2913 = vmatprep.mubr.f32.mxu0 %v2681
    %2914 = vmatmul.mubr.f32.gmra.mxu0 %v2680
    %v2915 = vpop.f32.mrf.mxu0
    %v2916 = vadd.f32 %v2737, %v2915
    %v2917 = vpop.f32.mrf.mxu0
    %2918 = vmatprep.mubr.f32.mxu0 %v2683
    %2919 = vmatmul.mubr.f32.gmra.mxu0 %v2682
    %v2920 = vpop.f32.mrf.mxu0
    %v2921 = vadd.f32 %v2737, %v2920
    %v2922 = vpop.f32.mrf.mxu0
    %2923 = vmatprep.mubr.f32.mxu0 %v2685
    %2924 = vmatmul.mubr.f32.gmra.mxu0 %v2684
    %v2925 = vpop.f32.mrf.mxu0
    %v2926 = vadd.f32 %v2737, %v2925
    %v2927 = vpop.f32.mrf.mxu0
    %2928 = vmatprep.mubr.f32.mxu0 %v2687
    %2929 = vmatmul.mubr.f32.gmra.mxu0 %v2686
    %v2930 = vpop.f32.mrf.mxu0
    %v2931 = vadd.f32 %v2737, %v2930
    %v2932 = vpop.f32.mrf.mxu0
    %2933 = vmatprep.mubr.f32.mxu0 %v2689
    %2934 = vmatmul.mubr.f32.gmra.mxu0 %v2688
    %v2935 = vpop.f32.mrf.mxu0
    %v2936 = vadd.f32 %v2737, %v2935
    %v2937 = vpop.f32.mrf.mxu0
    %2938 = vmatprep.mubr.f32.mxu0 %v2691
    %2939 = vmatmul.mubr.f32.gmra.mxu0 %v2690
    %v2940 = vpop.f32.mrf.mxu0
    %v2941 = vadd.f32 %v2737, %v2940
    %v2942 = vpop.f32.mrf.mxu0
    %2943 = vmatprep.mubr.f32.mxu0 %v2693
    %2944 = vmatmul.mubr.f32.gmra.mxu0 %v2692
    %v2945 = vpop.f32.mrf.mxu0
    %v2946 = vadd.f32 %v2737, %v2945
    %v2947 = vpop.f32.mrf.mxu0
    %2948 = vmatprep.mubr.f32.mxu0 %v2695
    %2949 = vmatmul.mubr.f32.gmra.mxu0 %v2694
    %v2950 = vpop.f32.mrf.mxu0
    %v2951 = vadd.f32 %v2737, %v2950
    %v2952 = vpop.f32.mrf.mxu0
    %2953 = vmatprep.mubr.f32.mxu0 %v2697
    %2954 = vmatmul.mubr.f32.gmra.mxu0 %v2696
    %v2955 = vpop.f32.mrf.mxu0
    %v2956 = vadd.f32 %v2737, %v2955
    %v2957 = vpop.f32.mrf.mxu0
    %2958 = vmatprep.mubr.f32.mxu0 %v2699
    %2959 = vmatmul.mubr.f32.gmra.mxu0 %v2698
    %v2960 = vpop.f32.mrf.mxu0
    %v2961 = vadd.f32 %v2737, %v2960
    %v2962 = vpop.f32.mrf.mxu0
    %2963 = vdwg.mxu0
    %2964 = vst [vmem:[%s8] sm:$0xff] %v2806
    %2965 = vst [vmem:[%s8 + $0x8] sm:$0xff] %v2811
    %2966 = vst [vmem:[%s8 + $0x10] sm:$0xff] %v2816
    %2967 = vst [vmem:[%s8 + $0x18] sm:$0xff] %v2821
    %2968 = vst [vmem:[%s8 + $0x20] sm:$0xff] %v2826
    %2969 = vst [vmem:[%s8 + $0x28] sm:$0xff] %v2831
    %2970 = vst [vmem:[%s8 + $0x30] sm:$0xff] %v2836
    %2971 = vst [vmem:[%s8 + $0x38] sm:$0xff] %v2841
    %2972 = vst [vmem:[%s8 + $0x40] sm:$0xff] %v2846
    %2973 = vst [vmem:[%s8 + $0x48] sm:$0xff] %v2851
    %2974 = vst [vmem:[%s8 + $0x50] sm:$0xff] %v2856
    %2975 = vst [vmem:[%s8 + $0x58] sm:$0xff] %v2861
    %2976 = vst [vmem:[%s8 + $0x60] sm:$0xff] %v2866
    %2977 = vst [vmem:[%s8 + $0x68] sm:$0xff] %v2871
    %2978 = vst [vmem:[%s8 + $0x70] sm:$0xff] %v2876
    %2979 = vst [vmem:[%s8 + $0x78] sm:$0xff] %v2881
    %2980 = vst [vmem:[%s8 + $0x80] sm:$0xff] %v2886
    %2981 = vst [vmem:[%s8 + $0x88] sm:$0xff] %v2891
    %2982 = vst [vmem:[%s8 + $0x90] sm:$0xff] %v2896
    %2983 = vst [vmem:[%s8 + $0x98] sm:$0xff] %v2901
    %2984 = vst [vmem:[%s8 + $0xa0] sm:$0xff] %v2906
    %2985 = vst [vmem:[%s8 + $0xa8] sm:$0xff] %v2911
    %2986 = vst [vmem:[%s8 + $0xb0] sm:$0xff] %v2916
    %2987 = vst [vmem:[%s8 + $0xb8] sm:$0xff] %v2921
    %2988 = vst [vmem:[%s8 + $0xc0] sm:$0xff] %v2926
    %2989 = vst [vmem:[%s8 + $0xc8] sm:$0xff] %v2931
    %2990 = vst [vmem:[%s8 + $0xd0] sm:$0xff] %v2936
    %2991 = vst [vmem:[%s8 + $0xd8] sm:$0xff] %v2941
    %2992 = vst [vmem:[%s8 + $0xe0] sm:$0xff] %v2946
    %2993 = vst [vmem:[%s8 + $0xe8] sm:$0xff] %v2951
    %2994 = vst [vmem:[%s8 + $0xf0] sm:$0xff] %v2956
    %2995 = vst [vmem:[%s8 + $0xf8] sm:$0xff] %v2961
    // Predicated region
    $region38: #{discriminator_forward.1} parent=1 // pred_check
      _
    $region39: #{discriminator_forward.1} parent=1 // pred_check_branch
      %2997 = sbr.rel (0) target = $region41
    $region40: #{discriminator_forward.1} parent=1 // pred_region
      _
    $region41: #{discriminator_forward.1} parent=1 // pred_fallthru
      _
    // Predicated region
    $region42: #{discriminator_forward.1} parent=1 // pred_check
      _
    $region43: #{discriminator_forward.1} parent=1 // pred_check_branch
      %2999 = sbr.rel (0) target = $region45
    $region44: #{discriminator_forward.1} parent=1 // pred_region
      _
    $region45: #{discriminator_forward.1} parent=1 // pred_fallthru
      _
    %3000 = vsyncpa [#allocation3], 1

</llo_original>
